<compile_context>
chip_gen: v7x
topology: tpu7x:2x2x1
jax: 0.10.0
libtpu: 0.0.40
codegen_flags: <defaults>
</compile_context>

<pallas_src>
import functools
import math

import jax
import jax.numpy as jnp
from jax.experimental import pallas as pl
from jax.experimental.pallas import tpu as pltpu


ACT_DTYPE = jnp.bfloat16       # activation storage dtype (compute stays f32)
WEIGHT_DTYPE = jnp.bfloat16    # matmul weight storage dtype


def _vmem_limit_bytes():
    """Generation-aware VMEM budget: ~75% of physical, capped at 96 MiB.
    v7x (64 MiB physical) -> 48 MiB; v5e/v6e (128 MiB) -> 96 MiB."""
    try:
        cap = pltpu.get_tpu_info().vmem_capacity_bytes
    except Exception:
        cap = 64 * 1024 * 1024
    return int(min(cap * 3 // 4, 96 * 1024 * 1024))


VMEM_LIMIT = _vmem_limit_bytes()


def _row_tile(m, target=512):
    """Largest sublane (row) tile <= target that divides m and is a multiple of 8,
    else the full extent."""
    if m <= target:
        return m
    t = (target // 8) * 8
    while t >= 8:
        if m % t == 0:
            return t
        t -= 8
    return m


def _lane_tile(n, target=1024):
    """Largest lane tile <= target that divides n and is a multiple of 128,
    else the full extent."""
    if n <= target:
        return n
    t = (min(target, n) // 128) * 128
    while t >= 128:
        if n % t == 0:
            return t
        t -= 128
    return n


def _gelu(y):
    # tanh-approx GELU in f32 (EUP tanh)
    return 0.5 * y * (1.0 + jnp.tanh(0.7978845608028654 * (y + 0.044715 * y * y * y)))


def _layernorm_f32(y, gamma, beta):
    mu = jnp.mean(y, axis=-1, keepdims=True)
    yc = y - mu
    var = jnp.mean(yc * yc, axis=-1, keepdims=True)
    yn = yc * jax.lax.rsqrt(var + 1e-12)
    return yn * gamma.astype(jnp.float32) + beta.astype(jnp.float32)


# ---------------------------------------------------------------------------
# Embedding LayerNorm on the flattened (M = BN*S, H) activations (row-tiled)
# ---------------------------------------------------------------------------

def _embed_ln_kernel(x_ref, g_ref, b_ref, o_ref):
    x = x_ref[...].astype(jnp.float32)                         # (tm, H)
    o_ref[...] = _layernorm_f32(x, g_ref[...], b_ref[...]).astype(o_ref.dtype)


def embed_layernorm(x2d, g, b):
    M, H = x2d.shape
    tm = _row_tile(M, 1024)
    return pl.pallas_call(
        _embed_ln_kernel,
        out_shape=jax.ShapeDtypeStruct((M, H), ACT_DTYPE),
        grid=(M // tm,),
        in_specs=[
            pl.BlockSpec((tm, H), lambda i: (i, 0)),
            pl.BlockSpec((1, H), lambda i: (0, 0)),
            pl.BlockSpec((1, H), lambda i: (0, 0)),
        ],
        out_specs=pl.BlockSpec((tm, H), lambda i: (i, 0)),
        compiler_params=pltpu.CompilerParams(
            dimension_semantics=("parallel",), vmem_limit_bytes=VMEM_LIMIT),
    )(x2d, g.reshape(1, H), b.reshape(1, H))


# ---------------------------------------------------------------------------
# Generic dense: (M, K) @ (K, N_tile) + bias [+ GELU].  No K-reduction axis:
# the full contraction stays resident; x block is invariant across the N axis.
# Used for the fused QKV projection and FFN1.
# ---------------------------------------------------------------------------

def _dense_kernel(x_ref, w_ref, b_ref, o_ref, *, act):
    acc = jnp.dot(x_ref[...], w_ref[...], preferred_element_type=jnp.float32)
    y = acc + b_ref[...].astype(jnp.float32)
    if act == "gelu":
        y = _gelu(y)
    o_ref[...] = y.astype(o_ref.dtype)


def dense(x2d, w, b, *, act=None, tm_target=512, tn_target=1024):
    M, K = x2d.shape
    N = w.shape[1]
    tm = _row_tile(M, tm_target)
    tn = _lane_tile(N, tn_target)
    return pl.pallas_call(
        functools.partial(_dense_kernel, act=act),
        out_shape=jax.ShapeDtypeStruct((M, N), ACT_DTYPE),
        grid=(M // tm, N // tn),
        in_specs=[
            pl.BlockSpec((tm, K), lambda i, j: (i, 0)),   # x resident across N tiles
            pl.BlockSpec((K, tn), lambda i, j: (0, j)),
            pl.BlockSpec((1, tn), lambda i, j: (0, j)),
        ],
        out_specs=pl.BlockSpec((tm, tn), lambda i, j: (i, j)),
        compiler_params=pltpu.CompilerParams(
            dimension_semantics=("parallel", "arbitrary"),
            vmem_limit_bytes=VMEM_LIMIT),
    )(x2d, w, b.reshape(1, N))


# ---------------------------------------------------------------------------
# Dense + bias + residual + LayerNorm (fused epilogue).  Full-K, full-N blocks
# (N must be whole for the LayerNorm).  Used for attn-out and FFN2.
# ---------------------------------------------------------------------------

def _dense_res_ln_kernel(x_ref, w_ref, b_ref, res_ref, g_ref, beta_ref, o_ref):
    acc = jnp.dot(x_ref[...], w_ref[...], preferred_element_type=jnp.float32)
    y = acc + b_ref[...].astype(jnp.float32) + res_ref[...].astype(jnp.float32)
    o_ref[...] = _layernorm_f32(y, g_ref[...], beta_ref[...]).astype(o_ref.dtype)


def dense_residual_ln(x2d, w, b, res2d, g, beta, *, tm_target=256):
    M, K = x2d.shape
    N = w.shape[1]
    tm = _row_tile(M, tm_target)
    return pl.pallas_call(
        _dense_res_ln_kernel,
        out_shape=jax.ShapeDtypeStruct((M, N), ACT_DTYPE),
        grid=(M // tm,),
        in_specs=[
            pl.BlockSpec((tm, K), lambda i: (i, 0)),
            pl.BlockSpec((K, N), lambda i: (0, 0)),
            pl.BlockSpec((1, N), lambda i: (0, 0)),
            pl.BlockSpec((tm, N), lambda i: (i, 0)),
            pl.BlockSpec((1, N), lambda i: (0, 0)),
            pl.BlockSpec((1, N), lambda i: (0, 0)),
        ],
        out_specs=pl.BlockSpec((tm, N), lambda i: (i, 0)),
        compiler_params=pltpu.CompilerParams(
            dimension_semantics=("parallel",), vmem_limit_bytes=VMEM_LIMIT),
    )(x2d, w, b.reshape(1, N), res2d, g.reshape(1, N), beta.reshape(1, N))


# ---------------------------------------------------------------------------
# Attention: one grid step per sequence; all heads computed from the resident
# (S, 3H) QKV slab.  bf16 MXU matmuls (f32 accumulation); f32 softmax with
# approx reciprocal; output written as a single lane-dense (S, H) slab.
# The 1/sqrt(dh) scale was folded into W_q, so no per-element scale here.
# ---------------------------------------------------------------------------

def _attention_kernel(qkv_ref, bias_ref, o_ref, *, nh, dh):
    H = nh * dh
    bias = bias_ref[0]                                           # (1, S) f32
    outs = []
    for h in range(nh):                                          # static unroll
        q = qkv_ref[0, :, h * dh:(h + 1) * dh]                   # (S, dh) bf16
        k = qkv_ref[0, :, H + h * dh:H + (h + 1) * dh]
        v = qkv_ref[0, :, 2 * H + h * dh:2 * H + (h + 1) * dh]
        s = jax.lax.dot_general(q, k, (((1,), (1,)), ((), ())),
                                preferred_element_type=jnp.float32)   # (S, S) = q @ k.T
        s = s + bias
        m = jnp.max(s, axis=-1, keepdims=True)
        p = jnp.exp(s - m)
        p = p * pl.reciprocal(jnp.sum(p, axis=-1, keepdims=True), approx=True)
        outs.append(jnp.dot(p.astype(v.dtype), v,
                            preferred_element_type=jnp.float32))       # (S, dh)
    o_ref[0] = jnp.concatenate(outs, axis=-1).astype(o_ref.dtype)      # (S, H)


def attention(qkv, bias, *, nh, dh):
    BN, S, threeH = qkv.shape
    H = nh * dh
    kern = functools.partial(_attention_kernel, nh=nh, dh=dh)
    return pl.pallas_call(
        kern,
        out_shape=jax.ShapeDtypeStruct((BN, S, H), ACT_DTYPE),
        grid=(BN,),
        in_specs=[
            pl.BlockSpec((1, S, threeH), lambda b: (b, 0, 0)),   # packed QKV slab
            pl.BlockSpec((1, 1, S), lambda b: (b, 0, 0)),        # f32 mask bias
        ],
        out_specs=pl.BlockSpec((1, S, H), lambda b: (b, 0, 0)),
        compiler_params=pltpu.CompilerParams(
            dimension_semantics=("parallel",), vmem_limit_bytes=VMEM_LIMIT),
    )(qkv, bias)


# ---------------------------------------------------------------------------
# Pooler (tanh Linear on CLS) + classifier Linear(H, 1), fused (tiny shapes)
# ---------------------------------------------------------------------------

def _pooler_head_kernel(x_ref, pw_ref, pb_ref, cw_ref, cb_ref, o_ref):
    pooled = jnp.tanh(
        jnp.dot(x_ref[...], pw_ref[...], preferred_element_type=jnp.float32)
        + pb_ref[...])
    # dropout(p=0.2) is identity at inference (eval semantics)
    logits = jnp.dot(pooled, cw_ref[...].astype(jnp.float32),
                     preferred_element_type=jnp.float32) + cb_ref[...]
    o_ref[...] = logits


def pooler_head(cls_tok, pw, pb, cw, cb):
    BN, H = cls_tok.shape
    return pl.pallas_call(
        _pooler_head_kernel,
        out_shape=jax.ShapeDtypeStruct((BN, 1), jnp.float32),
        in_specs=[
            pl.BlockSpec((BN, H), lambda: (0, 0)),
            pl.BlockSpec((H, H), lambda: (0, 0)),
            pl.BlockSpec((1, H), lambda: (0, 0)),
            pl.BlockSpec((H, 1), lambda: (0, 0)),
            pl.BlockSpec((1, 1), lambda: (0, 0)),
        ],
        out_specs=pl.BlockSpec((BN, 1), lambda: (0, 0)),
        compiler_params=pltpu.CompilerParams(vmem_limit_bytes=VMEM_LIMIT),
    )(cls_tok, pw, pb.reshape(1, H), cw, cb.reshape(1, 1))


# ---------------------------------------------------------------------------
# Params (synthetic, deterministic) and forward
# ---------------------------------------------------------------------------

def init_params(key, cfg):
    H, I, nh = cfg["hidden"], cfg["intermediate"], cfg["heads"]
    dh = H // nh

    def nrm(k, shape):
        return jax.random.normal(k, shape, jnp.float32) * 0.02

    keys = jax.random.split(key, 5)
    params = {
        "word_emb": nrm(keys[0], (cfg["vocab"], H)),
        "pos_emb": nrm(keys[1], (cfg["max_pos"], H)),
        "type_emb": nrm(keys[2], (2, H)),
        "emb_ln_g": jnp.ones((H,), jnp.float32),
        "emb_ln_b": jnp.zeros((H,), jnp.float32),
        "pool_w": nrm(keys[3], (H, H)).astype(WEIGHT_DTYPE),
        "pool_b": jnp.zeros((H,), jnp.float32),
        "cls_w": nrm(keys[4], (H, 1)).astype(WEIGHT_DTYPE),
        "cls_b": jnp.zeros((1,), jnp.float32),
        "layers": [],
    }
    inv_sqrt_dh = 1.0 / math.sqrt(dh)
    for li in range(cfg["layers"]):
        lk = jax.random.split(jax.random.fold_in(key, 100 + li), 6)
        wq, wk, wv = nrm(lk[0], (H, H)), nrm(lk[1], (H, H)), nrm(lk[2], (H, H))
        # packed QKV weight = concat([Wq, Wk, Wv], axis=1), with the 1/sqrt(dh)
        # softmax scale folded into W_q (and b_q; zero-init here) at prep time.
        wqkv = jnp.concatenate([wq * inv_sqrt_dh, wk, wv], axis=1).astype(WEIGHT_DTYPE)
        params["layers"].append({
            "wqkv": wqkv,                                 # (H, 3H)
            "bqkv": jnp.zeros((3 * H,), jnp.float32),
            "wo": nrm(lk[3], (H, H)).astype(WEIGHT_DTYPE),
            "bo": jnp.zeros((H,), jnp.float32),
            "ln1_g": jnp.ones((H,), jnp.float32), "ln1_b": jnp.zeros((H,), jnp.float32),
            "w1": nrm(lk[4], (H, I)).astype(WEIGHT_DTYPE), "b1": jnp.zeros((I,), jnp.float32),
            "w2": nrm(lk[5], (I, H)).astype(WEIGHT_DTYPE), "b2": jnp.zeros((H,), jnp.float32),
            "ln2_g": jnp.ones((H,), jnp.float32), "ln2_b": jnp.zeros((H,), jnp.float32),
        })
    return params


def bert_mc_forward(params, input_ids, attention_mask, *, cfg):
    B, C, S = input_ids.shape
    BN = B * C
    H = cfg["hidden"]
    nh = cfg["heads"]
    dh = H // nh
    M = BN * S

    ids = input_ids.reshape(BN, S)
    mask = attention_mask.reshape(BN, S).astype(jnp.float32)

    # --- embeddings (gather is plain-JAX glue; LayerNorm in Pallas) ---
    emb = (params["word_emb"][ids]
           + params["pos_emb"][:S][None, :, :]
           + params["type_emb"][0][None, None, :])               # token_type_ids == 0
    h2d = embed_layernorm(emb.reshape(M, H),
                          params["emb_ln_g"], params["emb_ln_b"])  # (M, H) bf16

    # additive attention-mask bias, kept in f32
    bias = ((1.0 - mask) * -1e9).reshape(BN, 1, S)

    # --- transformer encoder layers (activations stay flattened (M, ·) between
    #     kernels; only attention sees the (BN, S, ·) view via free reshapes) ---
    for lp in params["layers"]:
        qkv = dense(h2d, lp["wqkv"], lp["bqkv"])                  # (M, 3H), Q pre-scaled
        ctx = attention(qkv.reshape(BN, S, 3 * H), bias, nh=nh, dh=dh)  # (BN, S, H)
        h2d = dense_residual_ln(ctx.reshape(M, H), lp["wo"], lp["bo"],
                                h2d, lp["ln1_g"], lp["ln1_b"])    # (M, H)
        ff = dense(h2d, lp["w1"], lp["b1"], act="gelu")           # (M, I)
        h2d = dense_residual_ln(ff, lp["w2"], lp["b2"],
                                h2d, lp["ln2_g"], lp["ln2_b"])    # (M, H)

    # --- pooler + classifier on CLS token ---
    cls_tok = h2d.reshape(BN, S, H)[:, 0, :]                      # (BN, H)
    logits = pooler_head(cls_tok, params["pool_w"], params["pool_b"],
                         params["cls_w"], params["cls_b"])        # (BN, 1) f32
    return logits.reshape(B, C)


if __name__ == "__main__":
    cfg = dict(vocab=100, hidden=32, heads=2, layers=2, intermediate=64, max_pos=16)
    B, C, S = 2, 5, 8   # batch=2, num_choices=5, seq_len=8

    key = jax.random.PRNGKey(0)
    k_ids, k_params = jax.random.split(key)
    input_ids = jax.random.randint(k_ids, (B, C, S), 0, cfg["vocab"], dtype=jnp.int32)
    attention_mask = jnp.ones((B, C, S), dtype=jnp.int32)

    params = init_params(k_params, cfg)

    fwd = jax.jit(functools.partial(bert_mc_forward, cfg=cfg))
    logits = fwd(params, input_ids, attention_mask)
    jax.block_until_ready(logits)

    assert logits.shape == (B, C), logits.shape
    assert bool(jnp.all(jnp.isfinite(logits)))
    print("KERNEL_OK")
</pallas_src>

<mosaic_0001>
module attributes {stable_mosaic.version = 11 : i64} {
  func.func @_dense_kernel(%arg0: i32, %arg1: i32, %arg2: memref<80x32xbf16, #tpu.memory_space<vmem>>, %arg3: memref<32x96xbf16, #tpu.memory_space<vmem>>, %arg4: memref<1x96xf32, #tpu.memory_space<vmem>>, %arg5: memref<80x96xbf16, #tpu.memory_space<vmem>>) attributes {dimension_semantics = [#tpu.dimension_semantics<parallel>, #tpu.dimension_semantics<arbitrary>], iteration_bounds = array<i64: 1, 1>, scalar_prefetch = 0 : i64, scratch_operands = 0 : i64, tpu.core_type = #tpu.core_type<tc>, window_params = [{transform_indices = @transform_0, window_bounds = array<i64: 80, 32>}, {transform_indices = @transform_1, window_bounds = array<i64: 32, 96>}, {transform_indices = @transform_2, window_bounds = array<i64: 1, 96>}, {transform_indices = @transform_3, window_bounds = array<i64: 80, 96>}]} {
    %c0 = arith.constant 0 : index
    %c0_0 = arith.constant 0 : index
    %0 = vector.load %arg2[%c0, %c0_0] : memref<80x32xbf16, #tpu.memory_space<vmem>>, vector<80x32xbf16>
    %c0_1 = arith.constant 0 : index
    %c0_2 = arith.constant 0 : index
    %1 = vector.load %arg3[%c0_1, %c0_2] : memref<32x96xbf16, #tpu.memory_space<vmem>>, vector<32x96xbf16>
    %cst = arith.constant dense<0.000000e+00> : vector<80x96xf32>
    %2 = tpu.matmul %0, %1, %cst {dimension_numbers = #tpu.dot_dimension_numbers<[1], [0], [0], [1], [0, 0, 1, 1], [], []>} : vector<80x32xbf16>, vector<32x96xbf16>, vector<80x96xf32> -> vector<80x96xf32>
    %c0_3 = arith.constant 0 : index
    %c0_4 = arith.constant 0 : index
    %3 = vector.load %arg4[%c0_3, %c0_4] : memref<1x96xf32, #tpu.memory_space<vmem>>, vector<1x96xf32>
    %4 = vector.broadcast %3 : vector<1x96xf32> to vector<80x96xf32>
    %5 = arith.addf %2, %4 : vector<80x96xf32>
    %6 = arith.truncf %5 : vector<80x96xf32> to vector<80x96xbf16>
    %c0_5 = arith.constant 0 : index
    %c0_6 = arith.constant 0 : index
    %7 = vector.load %arg5[%c0_5, %c0_6] : memref<80x96xbf16, #tpu.memory_space<vmem>>, vector<80x96xbf16>
    tpu.vector_store %arg5[%c0_5, %c0_6], %6 {strides = array<i32>} : memref<80x96xbf16, #tpu.memory_space<vmem>>, vector<80x96xbf16>,
    return
  }
  func.func @transform_0(%arg0: i32, %arg1: i32) -> (i32, i32) {
    %c0_i32 = arith.constant 0 : i32
    %c0_i32_0 = arith.constant 0 : i32
    return %arg0, %c0_i32 : i32, i32
  }
  func.func @transform_1(%arg0: i32, %arg1: i32) -> (i32, i32) {
    %c0_i32 = arith.constant 0 : i32
    %c0_i32_0 = arith.constant 0 : i32
    return %c0_i32, %arg1 : i32, i32
  }
  func.func @transform_2(%arg0: i32, %arg1: i32) -> (i32, i32) {
    %c0_i32 = arith.constant 0 : i32
    %c0_i32_0 = arith.constant 0 : i32
    return %c0_i32, %arg1 : i32, i32
  }
  func.func @transform_3(%arg0: i32, %arg1: i32) -> (i32, i32) {
    %c0_i32 = arith.constant 0 : i32
    return %arg0, %arg1 : i32, i32
  }
}

module attributes {stable_mosaic.version = 11 : i64} {
  func.func @_embed_ln_kernel(%arg0: i32, %arg1: memref<80x32xf32, #tpu.memory_space<vmem>>, %arg2: memref<1x32xf32, #tpu.memory_space<vmem>>, %arg3: memref<1x32xf32, #tpu.memory_space<vmem>>, %arg4: memref<80x32xbf16, #tpu.memory_space<vmem>>) attributes {dimension_semantics = [#tpu.dimension_semantics<parallel>], iteration_bounds = array<i64: 1>, scalar_prefetch = 0 : i64, scratch_operands = 0 : i64, tpu.core_type = #tpu.core_type<tc>, window_params = [{transform_indices = @transform_0, window_bounds = array<i64: 80, 32>}, {pipeline_mode = #tpu.pipeline_mode<synchronous>, transform_indices = @transform_1, window_bounds = array<i64: 1, 32>}, {pipeline_mode = #tpu.pipeline_mode<synchronous>, transform_indices = @transform_2, window_bounds = array<i64: 1, 32>}, {transform_indices = @transform_3, window_bounds = array<i64: 80, 32>}]} {
    %c0 = arith.constant 0 : index
    %c0_0 = arith.constant 0 : index
    %0 = vector.load %arg1[%c0, %c0_0] : memref<80x32xf32, #tpu.memory_space<vmem>>, vector<80x32xf32>
    %c0_1 = arith.constant 0 : index
    %c0_2 = arith.constant 0 : index
    %1 = vector.load %arg2[%c0_1, %c0_2] : memref<1x32xf32, #tpu.memory_space<vmem>>, vector<1x32xf32>
    %c0_3 = arith.constant 0 : index
    %c0_4 = arith.constant 0 : index
    %2 = vector.load %arg3[%c0_3, %c0_4] : memref<1x32xf32, #tpu.memory_space<vmem>>, vector<1x32xf32>
    %cst = arith.constant dense<0.000000e+00> : vector<80xf32>
    %3 = vector.multi_reduction <add>, %0, %cst [1] : vector<80x32xf32> to vector<80xf32>
    %4 = vector.shape_cast %3 : vector<80xf32> to vector<80x1xf32>
    %cst_5 = arith.constant 3.200000e+01 : f32
    %5 = vector.broadcast %cst_5 : f32 to vector<80x1xf32>
    %6 = arith.divf %4, %5 : vector<80x1xf32>
    %7 = vector.broadcast %6 : vector<80x1xf32> to vector<80x32xf32>
    %8 = arith.subf %0, %7 : vector<80x32xf32>
    %9 = arith.mulf %8, %8 : vector<80x32xf32>
    %cst_6 = arith.constant dense<0.000000e+00> : vector<80xf32>
    %10 = vector.multi_reduction <add>, %9, %cst_6 [1] : vector<80x32xf32> to vector<80xf32>
    %11 = vector.shape_cast %10 : vector<80xf32> to vector<80x1xf32>
    %cst_7 = arith.constant 3.200000e+01 : f32
    %12 = vector.broadcast %cst_7 : f32 to vector<80x1xf32>
    %13 = arith.divf %11, %12 : vector<80x1xf32>
    %cst_8 = arith.constant 9.99999996E-13 : f32
    %14 = vector.broadcast %cst_8 : f32 to vector<80x1xf32>
    %15 = arith.addf %13, %14 : vector<80x1xf32>
    %16 = math.rsqrt %15 : vector<80x1xf32>
    %17 = vector.broadcast %16 : vector<80x1xf32> to vector<80x32xf32>
    %18 = arith.mulf %8, %17 : vector<80x32xf32>
    %19 = vector.broadcast %1 : vector<1x32xf32> to vector<80x32xf32>
    %20 = arith.mulf %18, %19 : vector<80x32xf32>
    %21 = vector.broadcast %2 : vector<1x32xf32> to vector<80x32xf32>
    %22 = arith.addf %20, %21 : vector<80x32xf32>
    %23 = arith.truncf %22 : vector<80x32xf32> to vector<80x32xbf16>
    %c0_9 = arith.constant 0 : index
    %c0_10 = arith.constant 0 : index
    %24 = vector.load %arg4[%c0_9, %c0_10] : memref<80x32xbf16, #tpu.memory_space<vmem>>, vector<80x32xbf16>
    tpu.vector_store %arg4[%c0_9, %c0_10], %23 {strides = array<i32>} : memref<80x32xbf16, #tpu.memory_space<vmem>>, vector<80x32xbf16>,
    return
  }
  func.func @transform_0(%arg0: i32) -> (i32, i32) {
    %c0_i32 = arith.constant 0 : i32
    %c0_i32_0 = arith.constant 0 : i32
    return %arg0, %c0_i32 : i32, i32
  }
  func.func @transform_1(%arg0: i32) -> (i32, i32) {
    %c0_i32 = arith.constant 0 : i32
    %c0_i32_0 = arith.constant 0 : i32
    %c0_i32_1 = arith.constant 0 : i32
    return %c0_i32, %c0_i32_0 : i32, i32
  }
  func.func @transform_2(%arg0: i32) -> (i32, i32) {
    %c0_i32 = arith.constant 0 : i32
    %c0_i32_0 = arith.constant 0 : i32
    %c0_i32_1 = arith.constant 0 : i32
    return %c0_i32, %c0_i32_0 : i32, i32
  }
  func.func @transform_3(%arg0: i32) -> (i32, i32) {
    %c0_i32 = arith.constant 0 : i32
    %c0_i32_0 = arith.constant 0 : i32
    return %arg0, %c0_i32 : i32, i32
  }
}

module attributes {stable_mosaic.version = 11 : i64} {
  func.func @_attention_kernel(%arg0: i32, %arg1: memref<1x8x96xbf16, #tpu.memory_space<vmem>>, %arg2: memref<1x1x8xf32, #tpu.memory_space<vmem>>, %arg3: memref<1x8x32xbf16, #tpu.memory_space<vmem>>) attributes {dimension_semantics = [#tpu.dimension_semantics<parallel>], iteration_bounds = array<i64: 10>, scalar_prefetch = 0 : i64, scratch_operands = 0 : i64, tpu.core_type = #tpu.core_type<tc>, window_params = [{transform_indices = @transform_0, window_bounds = array<i64: 1, 8, 96>}, {transform_indices = @transform_1, window_bounds = array<i64: 1, 1, 8>}, {transform_indices = @transform_2, window_bounds = array<i64: 1, 8, 32>}]} {
    %c0 = arith.constant 0 : index
    %c0_0 = arith.constant 0 : index
    %c0_1 = arith.constant 0 : index
    %0 = vector.load %arg2[%c0, %c0_0, %c0_1] : memref<1x1x8xf32, #tpu.memory_space<vmem>>, vector<1x1x8xf32>
    %1 = vector.shape_cast %0 : vector<1x1x8xf32> to vector<1x8xf32>
    %c0_2 = arith.constant 0 : index
    %c0_3 = arith.constant 0 : index
    %c0_4 = arith.constant 0 : index
    %2 = vector.load %arg1[%c0_2, %c0_3, %c0_4] : memref<1x8x96xbf16, #tpu.memory_space<vmem>>, vector<1x8x16xbf16>
    %3 = vector.shape_cast %2 : vector<1x8x16xbf16> to vector<8x16xbf16>
    %c0_5 = arith.constant 0 : index
    %c0_6 = arith.constant 0 : index
    %c32 = arith.constant 32 : index
    %4 = vector.load %arg1[%c0_5, %c0_6, %c32] : memref<1x8x96xbf16, #tpu.memory_space<vmem>>, vector<1x8x16xbf16>
    %5 = vector.shape_cast %4 : vector<1x8x16xbf16> to vector<8x16xbf16>
    %c0_7 = arith.constant 0 : index
    %c0_8 = arith.constant 0 : index
    %c64 = arith.constant 64 : index
    %6 = vector.load %arg1[%c0_7, %c0_8, %c64] : memref<1x8x96xbf16, #tpu.memory_space<vmem>>, vector<1x8x16xbf16>
    %7 = vector.shape_cast %6 : vector<1x8x16xbf16> to vector<8x16xbf16>
    %cst = arith.constant dense<0.000000e+00> : vector<8x8xf32>
    %8 = tpu.matmul %3, %5, %cst {dimension_numbers = #tpu.dot_dimension_numbers<[1], [1], [0], [0], [0, 0, 1, 0], [], []>} : vector<8x16xbf16>, vector<8x16xbf16>, vector<8x8xf32> -> vector<8x8xf32>
    %9 = vector.broadcast %1 : vector<1x8xf32> to vector<8x8xf32>
    %10 = arith.addf %8, %9 : vector<8x8xf32>
    %cst_9 = arith.constant dense<0xFF800000> : vector<8xf32>
    %11 = vector.multi_reduction <maximumf>, %10, %cst_9 [1] : vector<8x8xf32> to vector<8xf32>
    %12 = vector.shape_cast %11 : vector<8xf32> to vector<8x1xf32>
    %13 = vector.broadcast %12 : vector<8x1xf32> to vector<8x8xf32>
    %14 = arith.subf %10, %13 : vector<8x8xf32>
    %15 = math.exp %14 : vector<8x8xf32>
    %cst_10 = arith.constant dense<0.000000e+00> : vector<8xf32>
    %16 = vector.multi_reduction <add>, %15, %cst_10 [1] : vector<8x8xf32> to vector<8xf32>
    %17 = vector.shape_cast %16 : vector<8xf32> to vector<8x1xf32>
    %18 = tpu.reciprocal %17 {approx = true} : vector<8x1xf32> -> vector<8x1xf32>
    %19 = vector.broadcast %18 : vector<8x1xf32> to vector<8x8xf32>
    %20 = arith.mulf %15, %19 : vector<8x8xf32>
    %21 = arith.truncf %20 : vector<8x8xf32> to vector<8x8xbf16>
    %cst_11 = arith.constant dense<0.000000e+00> : vector<8x16xf32>
    %22 = tpu.matmul %21, %7, %cst_11 {dimension_numbers = #tpu.dot_dimension_numbers<[1], [0], [0], [1], [0, 0, 1, 1], [], []>} : vector<8x8xbf16>, vector<8x16xbf16>, vector<8x16xf32> -> vector<8x16xf32>
    %c0_12 = arith.constant 0 : index
    %c0_13 = arith.constant 0 : index
    %c16 = arith.constant 16 : index
    %23 = vector.load %arg1[%c0_12, %c0_13, %c16] : memref<1x8x96xbf16, #tpu.memory_space<vmem>>, vector<1x8x16xbf16>
    %24 = vector.shape_cast %23 : vector<1x8x16xbf16> to vector<8x16xbf16>
    %c0_14 = arith.constant 0 : index
    %c0_15 = arith.constant 0 : index
    %c48 = arith.constant 48 : index
    %25 = vector.load %arg1[%c0_14, %c0_15, %c48] : memref<1x8x96xbf16, #tpu.memory_space<vmem>>, vector<1x8x16xbf16>
    %26 = vector.shape_cast %25 : vector<1x8x16xbf16> to vector<8x16xbf16>
    %c0_16 = arith.constant 0 : index
    %c0_17 = arith.constant 0 : index
    %c80 = arith.constant 80 : index
    %27 = vector.load %arg1[%c0_16, %c0_17, %c80] : memref<1x8x96xbf16, #tpu.memory_space<vmem>>, vector<1x8x16xbf16>
    %28 = vector.shape_cast %27 : vector<1x8x16xbf16> to vector<8x16xbf16>
    %cst_18 = arith.constant dense<0.000000e+00> : vector<8x8xf32>
    %29 = tpu.matmul %24, %26, %cst_18 {dimension_numbers = #tpu.dot_dimension_numbers<[1], [1], [0], [0], [0, 0, 1, 0], [], []>} : vector<8x16xbf16>, vector<8x16xbf16>, vector<8x8xf32> -> vector<8x8xf32>
    %30 = vector.broadcast %1 : vector<1x8xf32> to vector<8x8xf32>
    %31 = arith.addf %29, %30 : vector<8x8xf32>
    %cst_19 = arith.constant dense<0xFF800000> : vector<8xf32>
    %32 = vector.multi_reduction <maximumf>, %31, %cst_19 [1] : vector<8x8xf32> to vector<8xf32>
    %33 = vector.shape_cast %32 : vector<8xf32> to vector<8x1xf32>
    %34 = vector.broadcast %33 : vector<8x1xf32> to vector<8x8xf32>
    %35 = arith.subf %31, %34 : vector<8x8xf32>
    %36 = math.exp %35 : vector<8x8xf32>
    %cst_20 = arith.constant dense<0.000000e+00> : vector<8xf32>
    %37 = vector.multi_reduction <add>, %36, %cst_20 [1] : vector<8x8xf32> to vector<8xf32>
    %38 = vector.shape_cast %37 : vector<8xf32> to vector<8x1xf32>
    %39 = tpu.reciprocal %38 {approx = true} : vector<8x1xf32> -> vector<8x1xf32>
    %40 = vector.broadcast %39 : vector<8x1xf32> to vector<8x8xf32>
    %41 = arith.mulf %36, %40 : vector<8x8xf32>
    %42 = arith.truncf %41 : vector<8x8xf32> to vector<8x8xbf16>
    %cst_21 = arith.constant dense<0.000000e+00> : vector<8x16xf32>
    %43 = tpu.matmul %42, %28, %cst_21 {dimension_numbers = #tpu.dot_dimension_numbers<[1], [0], [0], [1], [0, 0, 1, 1], [], []>} : vector<8x8xbf16>, vector<8x16xbf16>, vector<8x16xf32> -> vector<8x16xf32>
    %44 = tpu.concatenate %22, %43 in 1 : vector<8x16xf32>, vector<8x16xf32> -> vector<8x32xf32>
    %45 = arith.truncf %44 : vector<8x32xf32> to vector<8x32xbf16>
    %c0_22 = arith.constant 0 : index
    %c0_23 = arith.constant 0 : index
    %c0_24 = arith.constant 0 : index
    %46 = vector.load %arg3[%c0_22, %c0_23, %c0_24] : memref<1x8x32xbf16, #tpu.memory_space<vmem>>, vector<1x8x32xbf16>
    %47 = vector.shape_cast %46 : vector<1x8x32xbf16> to vector<8x32xbf16>
    %48 = vector.shape_cast %45 : vector<8x32xbf16> to vector<1x8x32xbf16>
    tpu.vector_store %arg3[%c0_22, %c0_23, %c0_24], %48 {strides = array<i32>} : memref<1x8x32xbf16, #tpu.memory_space<vmem>>, vector<1x8x32xbf16>,
    return
  }
  func.func @transform_0(%arg0: i32) -> (i32, i32, i32) {
    %c0_i32 = arith.constant 0 : i32
    %c0_i32_0 = arith.constant 0 : i32
    %c0_i32_1 = arith.constant 0 : i32
    return %arg0, %c0_i32, %c0_i32_0 : i32, i32, i32
  }
  func.func @transform_1(%arg0: i32) -> (i32, i32, i32) {
    %c0_i32 = arith.constant 0 : i32
    %c0_i32_0 = arith.constant 0 : i32
    %c0_i32_1 = arith.constant 0 : i32
    return %arg0, %c0_i32, %c0_i32_0 : i32, i32, i32
  }
  func.func @transform_2(%arg0: i32) -> (i32, i32, i32) {
    %c0_i32 = arith.constant 0 : i32
    %c0_i32_0 = arith.constant 0 : i32
    %c0_i32_1 = arith.constant 0 : i32
    return %arg0, %c0_i32, %c0_i32_0 : i32, i32, i32
  }
}

module attributes {stable_mosaic.version = 11 : i64} {
  func.func @_dense_res_ln_kernel(%arg0: i32, %arg1: memref<80x32xbf16, #tpu.memory_space<vmem>>, %arg2: memref<32x32xbf16, #tpu.memory_space<vmem>>, %arg3: memref<1x32xf32, #tpu.memory_space<vmem>>, %arg4: memref<80x32xbf16, #tpu.memory_space<vmem>>, %arg5: memref<1x32xf32, #tpu.memory_space<vmem>>, %arg6: memref<1x32xf32, #tpu.memory_space<vmem>>, %arg7: memref<80x32xbf16, #tpu.memory_space<vmem>>) attributes {dimension_semantics = [#tpu.dimension_semantics<parallel>], iteration_bounds = array<i64: 1>, scalar_prefetch = 0 : i64, scratch_operands = 0 : i64, tpu.core_type = #tpu.core_type<tc>, window_params = [{transform_indices = @transform_0, window_bounds = array<i64: 80, 32>}, {pipeline_mode = #tpu.pipeline_mode<synchronous>, transform_indices = @transform_1, window_bounds = array<i64: 32, 32>}, {pipeline_mode = #tpu.pipeline_mode<synchronous>, transform_indices = @transform_2, window_bounds = array<i64: 1, 32>}, {transform_indices = @transform_3, window_bounds = array<i64: 80, 32>}, {pipeline_mode = #tpu.pipeline_mode<synchronous>, transform_indices = @transform_4, window_bounds = array<i64: 1, 32>}, {pipeline_mode = #tpu.pipeline_mode<synchronous>, transform_indices = @transform_5, window_bounds = array<i64: 1, 32>}, {transform_indices = @transform_6, window_bounds = array<i64: 80, 32>}]} {
    %c0 = arith.constant 0 : index
    %c0_0 = arith.constant 0 : index
    %0 = vector.load %arg1[%c0, %c0_0] : memref<80x32xbf16, #tpu.memory_space<vmem>>, vector<80x32xbf16>
    %c0_1 = arith.constant 0 : index
    %c0_2 = arith.constant 0 : index
    %1 = vector.load %arg2[%c0_1, %c0_2] : memref<32x32xbf16, #tpu.memory_space<vmem>>, vector<32x32xbf16>
    %cst = arith.constant dense<0.000000e+00> : vector<80x32xf32>
    %2 = tpu.matmul %0, %1, %cst {dimension_numbers = #tpu.dot_dimension_numbers<[1], [0], [0], [1], [0, 0, 1, 1], [], []>} : vector<80x32xbf16>, vector<32x32xbf16>, vector<80x32xf32> -> vector<80x32xf32>
    %c0_3 = arith.constant 0 : index
    %c0_4 = arith.constant 0 : index
    %3 = vector.load %arg3[%c0_3, %c0_4] : memref<1x32xf32, #tpu.memory_space<vmem>>, vector<1x32xf32>
    %4 = vector.broadcast %3 : vector<1x32xf32> to vector<80x32xf32>
    %5 = arith.addf %2, %4 : vector<80x32xf32>
    %c0_5 = arith.constant 0 : index
    %c0_6 = arith.constant 0 : index
    %6 = vector.load %arg4[%c0_5, %c0_6] : memref<80x32xbf16, #tpu.memory_space<vmem>>, vector<80x32xbf16>
    %7 = arith.extf %6 : vector<80x32xbf16> to vector<80x32xf32>
    %8 = arith.addf %5, %7 : vector<80x32xf32>
    %c0_7 = arith.constant 0 : index
    %c0_8 = arith.constant 0 : index
    %9 = vector.load %arg5[%c0_7, %c0_8] : memref<1x32xf32, #tpu.memory_space<vmem>>, vector<1x32xf32>
    %c0_9 = arith.constant 0 : index
    %c0_10 = arith.constant 0 : index
    %10 = vector.load %arg6[%c0_9, %c0_10] : memref<1x32xf32, #tpu.memory_space<vmem>>, vector<1x32xf32>
    %cst_11 = arith.constant dense<0.000000e+00> : vector<80xf32>
    %11 = vector.multi_reduction <add>, %8, %cst_11 [1] : vector<80x32xf32> to vector<80xf32>
    %12 = vector.shape_cast %11 : vector<80xf32> to vector<80x1xf32>
    %cst_12 = arith.constant 3.200000e+01 : f32
    %13 = vector.broadcast %cst_12 : f32 to vector<80x1xf32>
    %14 = arith.divf %12, %13 : vector<80x1xf32>
    %15 = vector.broadcast %14 : vector<80x1xf32> to vector<80x32xf32>
    %16 = arith.subf %8, %15 : vector<80x32xf32>
    %17 = arith.mulf %16, %16 : vector<80x32xf32>
    %cst_13 = arith.constant dense<0.000000e+00> : vector<80xf32>
    %18 = vector.multi_reduction <add>, %17, %cst_13 [1] : vector<80x32xf32> to vector<80xf32>
    %19 = vector.shape_cast %18 : vector<80xf32> to vector<80x1xf32>
    %cst_14 = arith.constant 3.200000e+01 : f32
    %20 = vector.broadcast %cst_14 : f32 to vector<80x1xf32>
    %21 = arith.divf %19, %20 : vector<80x1xf32>
    %cst_15 = arith.constant 9.99999996E-13 : f32
    %22 = vector.broadcast %cst_15 : f32 to vector<80x1xf32>
    %23 = arith.addf %21, %22 : vector<80x1xf32>
    %24 = math.rsqrt %23 : vector<80x1xf32>
    %25 = vector.broadcast %24 : vector<80x1xf32> to vector<80x32xf32>
    %26 = arith.mulf %16, %25 : vector<80x32xf32>
    %27 = vector.broadcast %9 : vector<1x32xf32> to vector<80x32xf32>
    %28 = arith.mulf %26, %27 : vector<80x32xf32>
    %29 = vector.broadcast %10 : vector<1x32xf32> to vector<80x32xf32>
    %30 = arith.addf %28, %29 : vector<80x32xf32>
    %31 = arith.truncf %30 : vector<80x32xf32> to vector<80x32xbf16>
    %c0_16 = arith.constant 0 : index
    %c0_17 = arith.constant 0 : index
    %32 = vector.load %arg7[%c0_16, %c0_17] : memref<80x32xbf16, #tpu.memory_space<vmem>>, vector<80x32xbf16>
    tpu.vector_store %arg7[%c0_16, %c0_17], %31 {strides = array<i32>} : memref<80x32xbf16, #tpu.memory_space<vmem>>, vector<80x32xbf16>,
    return
  }
  func.func @transform_0(%arg0: i32) -> (i32, i32) {
    %c0_i32 = arith.constant 0 : i32
    %c0_i32_0 = arith.constant 0 : i32
    return %arg0, %c0_i32 : i32, i32
  }
  func.func @transform_1(%arg0: i32) -> (i32, i32) {
    %c0_i32 = arith.constant 0 : i32
    %c0_i32_0 = arith.constant 0 : i32
    %c0_i32_1 = arith.constant 0 : i32
    return %c0_i32, %c0_i32_0 : i32, i32
  }
  func.func @transform_2(%arg0: i32) -> (i32, i32) {
    %c0_i32 = arith.constant 0 : i32
    %c0_i32_0 = arith.constant 0 : i32
    %c0_i32_1 = arith.constant 0 : i32
    return %c0_i32, %c0_i32_0 : i32, i32
  }
  func.func @transform_3(%arg0: i32) -> (i32, i32) {
    %c0_i32 = arith.constant 0 : i32
    %c0_i32_0 = arith.constant 0 : i32
    return %arg0, %c0_i32 : i32, i32
  }
  func.func @transform_4(%arg0: i32) -> (i32, i32) {
    %c0_i32 = arith.constant 0 : i32
    %c0_i32_0 = arith.constant 0 : i32
    %c0_i32_1 = arith.constant 0 : i32
    return %c0_i32, %c0_i32_0 : i32, i32
  }
  func.func @transform_5(%arg0: i32) -> (i32, i32) {
    %c0_i32 = arith.constant 0 : i32
    %c0_i32_0 = arith.constant 0 : i32
    %c0_i32_1 = arith.constant 0 : i32
    return %c0_i32, %c0_i32_0 : i32, i32
  }
  func.func @transform_6(%arg0: i32) -> (i32, i32) {
    %c0_i32 = arith.constant 0 : i32
    %c0_i32_0 = arith.constant 0 : i32
    return %arg0, %c0_i32 : i32, i32
  }
}

module attributes {stable_mosaic.version = 11 : i64} {
  func.func @_dense_kernel(%arg0: i32, %arg1: i32, %arg2: memref<80x32xbf16, #tpu.memory_space<vmem>>, %arg3: memref<32x64xbf16, #tpu.memory_space<vmem>>, %arg4: memref<1x64xf32, #tpu.memory_space<vmem>>, %arg5: memref<80x64xbf16, #tpu.memory_space<vmem>>) attributes {dimension_semantics = [#tpu.dimension_semantics<parallel>, #tpu.dimension_semantics<arbitrary>], iteration_bounds = array<i64: 1, 1>, scalar_prefetch = 0 : i64, scratch_operands = 0 : i64, tpu.core_type = #tpu.core_type<tc>, window_params = [{transform_indices = @transform_0, window_bounds = array<i64: 80, 32>}, {transform_indices = @transform_1, window_bounds = array<i64: 32, 64>}, {transform_indices = @transform_2, window_bounds = array<i64: 1, 64>}, {transform_indices = @transform_3, window_bounds = array<i64: 80, 64>}]} {
    %c0 = arith.constant 0 : index
    %c0_0 = arith.constant 0 : index
    %0 = vector.load %arg2[%c0, %c0_0] : memref<80x32xbf16, #tpu.memory_space<vmem>>, vector<80x32xbf16>
    %c0_1 = arith.constant 0 : index
    %c0_2 = arith.constant 0 : index
    %1 = vector.load %arg3[%c0_1, %c0_2] : memref<32x64xbf16, #tpu.memory_space<vmem>>, vector<32x64xbf16>
    %cst = arith.constant dense<0.000000e+00> : vector<80x64xf32>
    %2 = tpu.matmul %0, %1, %cst {dimension_numbers = #tpu.dot_dimension_numbers<[1], [0], [0], [1], [0, 0, 1, 1], [], []>} : vector<80x32xbf16>, vector<32x64xbf16>, vector<80x64xf32> -> vector<80x64xf32>
    %c0_3 = arith.constant 0 : index
    %c0_4 = arith.constant 0 : index
    %3 = vector.load %arg4[%c0_3, %c0_4] : memref<1x64xf32, #tpu.memory_space<vmem>>, vector<1x64xf32>
    %4 = vector.broadcast %3 : vector<1x64xf32> to vector<80x64xf32>
    %5 = arith.addf %2, %4 : vector<80x64xf32>
    %cst_5 = arith.constant 5.000000e-01 : f32
    %6 = vector.broadcast %cst_5 : f32 to vector<80x64xf32>
    %7 = arith.mulf %6, %5 : vector<80x64xf32>
    %cst_6 = arith.constant 4.471500e-02 : f32
    %8 = vector.broadcast %cst_6 : f32 to vector<80x64xf32>
    %9 = arith.mulf %8, %5 : vector<80x64xf32>
    %10 = arith.mulf %9, %5 : vector<80x64xf32>
    %11 = arith.mulf %10, %5 : vector<80x64xf32>
    %12 = arith.addf %5, %11 : vector<80x64xf32>
    %cst_7 = arith.constant 0.797884583 : f32
    %13 = vector.broadcast %cst_7 : f32 to vector<80x64xf32>
    %14 = arith.mulf %13, %12 : vector<80x64xf32>
    %15 = math.tanh %14 : vector<80x64xf32>
    %cst_8 = arith.constant 1.000000e+00 : f32
    %16 = vector.broadcast %cst_8 : f32 to vector<80x64xf32>
    %17 = arith.addf %16, %15 : vector<80x64xf32>
    %18 = arith.mulf %7, %17 : vector<80x64xf32>
    %19 = arith.truncf %18 : vector<80x64xf32> to vector<80x64xbf16>
    %c0_9 = arith.constant 0 : index
    %c0_10 = arith.constant 0 : index
    %20 = vector.load %arg5[%c0_9, %c0_10] : memref<80x64xbf16, #tpu.memory_space<vmem>>, vector<80x64xbf16>
    tpu.vector_store %arg5[%c0_9, %c0_10], %19 {strides = array<i32>} : memref<80x64xbf16, #tpu.memory_space<vmem>>, vector<80x64xbf16>,
    return
  }
  func.func @transform_0(%arg0: i32, %arg1: i32) -> (i32, i32) {
    %c0_i32 = arith.constant 0 : i32
    %c0_i32_0 = arith.constant 0 : i32
    return %arg0, %c0_i32 : i32, i32
  }
  func.func @transform_1(%arg0: i32, %arg1: i32) -> (i32, i32) {
    %c0_i32 = arith.constant 0 : i32
    %c0_i32_0 = arith.constant 0 : i32
    return %c0_i32, %arg1 : i32, i32
  }
  func.func @transform_2(%arg0: i32, %arg1: i32) -> (i32, i32) {
    %c0_i32 = arith.constant 0 : i32
    %c0_i32_0 = arith.constant 0 : i32
    return %c0_i32, %arg1 : i32, i32
  }
  func.func @transform_3(%arg0: i32, %arg1: i32) -> (i32, i32) {
    %c0_i32 = arith.constant 0 : i32
    return %arg0, %arg1 : i32, i32
  }
}

module attributes {stable_mosaic.version = 11 : i64} {
  func.func @_dense_res_ln_kernel(%arg0: i32, %arg1: memref<80x64xbf16, #tpu.memory_space<vmem>>, %arg2: memref<64x32xbf16, #tpu.memory_space<vmem>>, %arg3: memref<1x32xf32, #tpu.memory_space<vmem>>, %arg4: memref<80x32xbf16, #tpu.memory_space<vmem>>, %arg5: memref<1x32xf32, #tpu.memory_space<vmem>>, %arg6: memref<1x32xf32, #tpu.memory_space<vmem>>, %arg7: memref<80x32xbf16, #tpu.memory_space<vmem>>) attributes {dimension_semantics = [#tpu.dimension_semantics<parallel>], iteration_bounds = array<i64: 1>, scalar_prefetch = 0 : i64, scratch_operands = 0 : i64, tpu.core_type = #tpu.core_type<tc>, window_params = [{transform_indices = @transform_0, window_bounds = array<i64: 80, 64>}, {pipeline_mode = #tpu.pipeline_mode<synchronous>, transform_indices = @transform_1, window_bounds = array<i64: 64, 32>}, {pipeline_mode = #tpu.pipeline_mode<synchronous>, transform_indices = @transform_2, window_bounds = array<i64: 1, 32>}, {transform_indices = @transform_3, window_bounds = array<i64: 80, 32>}, {pipeline_mode = #tpu.pipeline_mode<synchronous>, transform_indices = @transform_4, window_bounds = array<i64: 1, 32>}, {pipeline_mode = #tpu.pipeline_mode<synchronous>, transform_indices = @transform_5, window_bounds = array<i64: 1, 32>}, {transform_indices = @transform_6, window_bounds = array<i64: 80, 32>}]} {
    %c0 = arith.constant 0 : index
    %c0_0 = arith.constant 0 : index
    %0 = vector.load %arg1[%c0, %c0_0] : memref<80x64xbf16, #tpu.memory_space<vmem>>, vector<80x64xbf16>
    %c0_1 = arith.constant 0 : index
    %c0_2 = arith.constant 0 : index
    %1 = vector.load %arg2[%c0_1, %c0_2] : memref<64x32xbf16, #tpu.memory_space<vmem>>, vector<64x32xbf16>
    %cst = arith.constant dense<0.000000e+00> : vector<80x32xf32>
    %2 = tpu.matmul %0, %1, %cst {dimension_numbers = #tpu.dot_dimension_numbers<[1], [0], [0], [1], [0, 0, 1, 1], [], []>} : vector<80x64xbf16>, vector<64x32xbf16>, vector<80x32xf32> -> vector<80x32xf32>
    %c0_3 = arith.constant 0 : index
    %c0_4 = arith.constant 0 : index
    %3 = vector.load %arg3[%c0_3, %c0_4] : memref<1x32xf32, #tpu.memory_space<vmem>>, vector<1x32xf32>
    %4 = vector.broadcast %3 : vector<1x32xf32> to vector<80x32xf32>
    %5 = arith.addf %2, %4 : vector<80x32xf32>
    %c0_5 = arith.constant 0 : index
    %c0_6 = arith.constant 0 : index
    %6 = vector.load %arg4[%c0_5, %c0_6] : memref<80x32xbf16, #tpu.memory_space<vmem>>, vector<80x32xbf16>
    %7 = arith.extf %6 : vector<80x32xbf16> to vector<80x32xf32>
    %8 = arith.addf %5, %7 : vector<80x32xf32>
    %c0_7 = arith.constant 0 : index
    %c0_8 = arith.constant 0 : index
    %9 = vector.load %arg5[%c0_7, %c0_8] : memref<1x32xf32, #tpu.memory_space<vmem>>, vector<1x32xf32>
    %c0_9 = arith.constant 0 : index
    %c0_10 = arith.constant 0 : index
    %10 = vector.load %arg6[%c0_9, %c0_10] : memref<1x32xf32, #tpu.memory_space<vmem>>, vector<1x32xf32>
    %cst_11 = arith.constant dense<0.000000e+00> : vector<80xf32>
    %11 = vector.multi_reduction <add>, %8, %cst_11 [1] : vector<80x32xf32> to vector<80xf32>
    %12 = vector.shape_cast %11 : vector<80xf32> to vector<80x1xf32>
    %cst_12 = arith.constant 3.200000e+01 : f32
    %13 = vector.broadcast %cst_12 : f32 to vector<80x1xf32>
    %14 = arith.divf %12, %13 : vector<80x1xf32>
    %15 = vector.broadcast %14 : vector<80x1xf32> to vector<80x32xf32>
    %16 = arith.subf %8, %15 : vector<80x32xf32>
    %17 = arith.mulf %16, %16 : vector<80x32xf32>
    %cst_13 = arith.constant dense<0.000000e+00> : vector<80xf32>
    %18 = vector.multi_reduction <add>, %17, %cst_13 [1] : vector<80x32xf32> to vector<80xf32>
    %19 = vector.shape_cast %18 : vector<80xf32> to vector<80x1xf32>
    %cst_14 = arith.constant 3.200000e+01 : f32
    %20 = vector.broadcast %cst_14 : f32 to vector<80x1xf32>
    %21 = arith.divf %19, %20 : vector<80x1xf32>
    %cst_15 = arith.constant 9.99999996E-13 : f32
    %22 = vector.broadcast %cst_15 : f32 to vector<80x1xf32>
    %23 = arith.addf %21, %22 : vector<80x1xf32>
    %24 = math.rsqrt %23 : vector<80x1xf32>
    %25 = vector.broadcast %24 : vector<80x1xf32> to vector<80x32xf32>
    %26 = arith.mulf %16, %25 : vector<80x32xf32>
    %27 = vector.broadcast %9 : vector<1x32xf32> to vector<80x32xf32>
    %28 = arith.mulf %26, %27 : vector<80x32xf32>
    %29 = vector.broadcast %10 : vector<1x32xf32> to vector<80x32xf32>
    %30 = arith.addf %28, %29 : vector<80x32xf32>
    %31 = arith.truncf %30 : vector<80x32xf32> to vector<80x32xbf16>
    %c0_16 = arith.constant 0 : index
    %c0_17 = arith.constant 0 : index
    %32 = vector.load %arg7[%c0_16, %c0_17] : memref<80x32xbf16, #tpu.memory_space<vmem>>, vector<80x32xbf16>
    tpu.vector_store %arg7[%c0_16, %c0_17], %31 {strides = array<i32>} : memref<80x32xbf16, #tpu.memory_space<vmem>>, vector<80x32xbf16>,
    return
  }
  func.func @transform_0(%arg0: i32) -> (i32, i32) {
    %c0_i32 = arith.constant 0 : i32
    %c0_i32_0 = arith.constant 0 : i32
    return %arg0, %c0_i32 : i32, i32
  }
  func.func @transform_1(%arg0: i32) -> (i32, i32) {
    %c0_i32 = arith.constant 0 : i32
    %c0_i32_0 = arith.constant 0 : i32
    %c0_i32_1 = arith.constant 0 : i32
    return %c0_i32, %c0_i32_0 : i32, i32
  }
  func.func @transform_2(%arg0: i32) -> (i32, i32) {
    %c0_i32 = arith.constant 0 : i32
    %c0_i32_0 = arith.constant 0 : i32
    %c0_i32_1 = arith.constant 0 : i32
    return %c0_i32, %c0_i32_0 : i32, i32
  }
  func.func @transform_3(%arg0: i32) -> (i32, i32) {
    %c0_i32 = arith.constant 0 : i32
    %c0_i32_0 = arith.constant 0 : i32
    return %arg0, %c0_i32 : i32, i32
  }
  func.func @transform_4(%arg0: i32) -> (i32, i32) {
    %c0_i32 = arith.constant 0 : i32
    %c0_i32_0 = arith.constant 0 : i32
    %c0_i32_1 = arith.constant 0 : i32
    return %c0_i32, %c0_i32_0 : i32, i32
  }
  func.func @transform_5(%arg0: i32) -> (i32, i32) {
    %c0_i32 = arith.constant 0 : i32
    %c0_i32_0 = arith.constant 0 : i32
    %c0_i32_1 = arith.constant 0 : i32
    return %c0_i32, %c0_i32_0 : i32, i32
  }
  func.func @transform_6(%arg0: i32) -> (i32, i32) {
    %c0_i32 = arith.constant 0 : i32
    %c0_i32_0 = arith.constant 0 : i32
    return %arg0, %c0_i32 : i32, i32
  }
}

module attributes {stable_mosaic.version = 11 : i64} {
  func.func @_pooler_head_kernel(%arg0: memref<10x32xbf16, #tpu.memory_space<vmem>>, %arg1: memref<32x32xbf16, #tpu.memory_space<vmem>>, %arg2: memref<1x32xf32, #tpu.memory_space<vmem>>, %arg3: memref<32x1xbf16, #tpu.memory_space<vmem>>, %arg4: memref<1x1xf32, #tpu.memory_space<vmem>>, %arg5: memref<10x1xf32, #tpu.memory_space<vmem>>) attributes {dimension_semantics = [], scalar_prefetch = 0 : i64, scratch_operands = 0 : i64, tpu.core_type = #tpu.core_type<tc>} {
    %c0 = arith.constant 0 : index
    %c0_0 = arith.constant 0 : index
    %0 = vector.load %arg0[%c0, %c0_0] : memref<10x32xbf16, #tpu.memory_space<vmem>>, vector<10x32xbf16>
    %c0_1 = arith.constant 0 : index
    %c0_2 = arith.constant 0 : index
    %1 = vector.load %arg1[%c0_1, %c0_2] : memref<32x32xbf16, #tpu.memory_space<vmem>>, vector<32x32xbf16>
    %cst = arith.constant dense<0.000000e+00> : vector<10x32xf32>
    %2 = tpu.matmul %0, %1, %cst {dimension_numbers = #tpu.dot_dimension_numbers<[1], [0], [0], [1], [0, 0, 1, 1], [], []>} : vector<10x32xbf16>, vector<32x32xbf16>, vector<10x32xf32> -> vector<10x32xf32>
    %c0_3 = arith.constant 0 : index
    %c0_4 = arith.constant 0 : index
    %3 = vector.load %arg2[%c0_3, %c0_4] : memref<1x32xf32, #tpu.memory_space<vmem>>, vector<1x32xf32>
    %4 = vector.broadcast %3 : vector<1x32xf32> to vector<10x32xf32>
    %5 = arith.addf %2, %4 : vector<10x32xf32>
    %6 = math.tanh %5 : vector<10x32xf32>
    %c0_5 = arith.constant 0 : index
    %c0_6 = arith.constant 0 : index
    %7 = vector.load %arg3[%c0_5, %c0_6] : memref<32x1xbf16, #tpu.memory_space<vmem>>, vector<32x1xbf16>
    %8 = arith.extf %7 : vector<32x1xbf16> to vector<32x1xf32>
    %cst_7 = arith.constant dense<0.000000e+00> : vector<10x1xf32>
    %9 = tpu.matmul %6, %8, %cst_7 {dimension_numbers = #tpu.dot_dimension_numbers<[1], [0], [0], [1], [0, 0, 1, 1], [], []>} : vector<10x32xf32>, vector<32x1xf32>, vector<10x1xf32> -> vector<10x1xf32>
    %c0_8 = arith.constant 0 : index
    %c0_9 = arith.constant 0 : index
    %10 = vector.load %arg4[%c0_8, %c0_9] : memref<1x1xf32, #tpu.memory_space<vmem>>, vector<1x1xf32>
    %11 = vector.broadcast %10 : vector<1x1xf32> to vector<10x1xf32>
    %12 = arith.addf %9, %11 : vector<10x1xf32>
    %c0_10 = arith.constant 0 : index
    %c0_11 = arith.constant 0 : index
    %13 = vector.load %arg5[%c0_10, %c0_11] : memref<10x1xf32, #tpu.memory_space<vmem>>, vector<10x1xf32>
    tpu.vector_store %arg5[%c0_10, %c0_11], %12 {strides = array<i32>} : memref<10x1xf32, #tpu.memory_space<vmem>>, vector<10x1xf32>,
    return
  }
}

</mosaic_0001>

<llo_original>
// kernel: bert_mc_forward.13
$region0: #{bert_mc_forward.13}
  #allocation0 [shape = 'u32[]', space=smem, size = 0x4, offset = 0x4, fixed_abs, tag = 'smem constant byte address 0x4 - core index']
  #allocation1 [shape = 'u32[144,128]{1,0:T(1,128)}', space=vmem, size = 0x12000, scoped, tag = 'internal scratch']
  %s0 = inlined_call_operand.vmem [shape: bf16[80,32], index: 0, kind: input, shape index: {}]
  %s1 = inlined_call_operand.vmem [shape: bf16[32,96], index: 1, kind: input, shape index: {}]
  %s2 = inlined_call_operand.vmem [shape: f32[1,96], index: 2, kind: input, shape index: {}]
  %s3 = inlined_call_operand.vmem [shape: bf16[80,96], index: 3, kind: output, shape index: {}]
  %s4 = sld [smem:[#allocation0]]
  $region22: #{bert_mc_forward.13} parent=0
    _
  %s6 = ssub.s32 1, %s4
  %s7 = scalar_select 0, %s6, %s4
  // Predicated region
  $region2: #{bert_mc_forward.13} parent=0 // pred_check
    _
  $region3: #{bert_mc_forward.13} parent=0 // pred_check_branch
    %9 = sbr.rel (0) target = $region5
  $region4: #{bert_mc_forward.13} parent=0 // pred_region
    _
  $region5: #{bert_mc_forward.13} parent=0 // pred_fallthru
    _
  // Predicated region
  $region6: #{bert_mc_forward.13} parent=0 // pred_check
    _
  $region7: #{bert_mc_forward.13} parent=0 // pred_check_branch
    %11 = sbr.rel (0) target = $region9
  $region8: #{bert_mc_forward.13} parent=0 // pred_region
    _
  $region9: #{bert_mc_forward.13} parent=0 // pred_fallthru
    _
  // Predicated region
  $region10: #{bert_mc_forward.13} parent=0 // pred_check
    _
  $region11: #{bert_mc_forward.13} parent=0 // pred_check_branch
    %13 = sbr.rel (0) target = $region13
  $region12: #{bert_mc_forward.13} parent=0 // pred_region
    _
  $region13: #{bert_mc_forward.13} parent=0 // pred_fallthru
    _
  %v15 = vld [vmem:[%s0] sm:$0xf]
  %v16 = vld [vmem:[%s0 + $0x4] sm:$0xf]
  %v17 = vld [vmem:[%s0 + $0x8] sm:$0xf]
  %v18 = vld [vmem:[%s0 + $0xc] sm:$0xf]
  %v19 = vld [vmem:[%s0 + $0x10] sm:$0xf]
  %v20 = vld [vmem:[%s0 + $0x14] sm:$0xf]
  %v21 = vld [vmem:[%s0 + $0x18] sm:$0xf]
  %v22 = vld [vmem:[%s0 + $0x1c] sm:$0xf]
  %v23 = vld [vmem:[%s0 + $0x20] sm:$0xf]
  %v24 = vld [vmem:[%s0 + $0x24] sm:$0xf]
  %v25 = vld [vmem:[%s1] sm:$0xf]
  %v26 = vld [vmem:[%s1 + $0x4] sm:$0xf]
  %v27 = vld [vmem:[%s1 + $0x8] sm:$0xf]
  %v28 = vld [vmem:[%s1 + $0xc] sm:$0xf]
  %v29 = vld [vmem:[%s2] sm:$0x1]
  %v31 = vlaneseq
  %v32 = vshrl.u32 %v31, 7
  %v33 = vsub.s32 0, %v32
  %v34 = vrot.slane %v29, %v33
  %v46 = vunpack.c.l.b16 %v15
  %v47 = vunpack.c.l.b16 %v16
  %v48 = vunpack.c.l.b16 %v17
  %v49 = vunpack.c.l.b16 %v18
  %v50 = vunpack.c.l.b16 %v19
  %v51 = vunpack.c.l.b16 %v20
  %v52 = vunpack.c.l.b16 %v21
  %v53 = vunpack.c.l.b16 %v22
  %v54 = vunpack.c.l.b16 %v23
  %v55 = vunpack.c.l.b16 %v24
  %v56 = vpack.c.b16 %v47, %v46
  %v57 = vpack.c.b16 %v49, %v48
  %v58 = vpack.c.b16 %v51, %v50
  %v59 = vpack.c.b16 %v53, %v52
  %v60 = vpack.c.b16 %v55, %v54
  %v65 = vunpack.c.l.b16 %v25
  %v66 = vunpack.c.l.b16 %v26
  %v67 = vunpack.c.l.b16 %v27
  %v68 = vunpack.c.l.b16 %v28
  %v69 = vpack.c.b16 %v66, %v65
  %v70 = vpack.c.b16 %v68, %v67
  %vm73 = vcmask 261120
  %v75 = vsel %vm73, %v56, 0
  %v78 = vsel %vm73, %v57, 0
  %v81 = vsel %vm73, %v58, 0
  %v84 = vsel %vm73, %v59, 0
  %v87 = vsel %vm73, %v60, 0
  %89 = vmatprep.subr.bf16.mxu0 0
  %90 = vmatpush1.bf16.msra.mxu0 %v69
  %91 = vmatprep.subr.bf16.mxu0 0
  %92 = vmatpush1.bf16.msra.mxu0 %v70
  %93 = vmatprep.subr.bf16.mxu0 0
  %94 = vmatpush1.bf16.msra.mxu0 0
  %95 = vmatprep.subr.bf16.mxu0 0
  %96 = vmatpush1.bf16.msra.mxu0 0
  %97 = vmatprep.subr.bf16.mxu0 0
  %98 = vmatpush1.bf16.msra.mxu0 0
  %99 = vmatprep.subr.bf16.mxu0 0
  %100 = vmatpush1.bf16.msra.mxu0 0
  %101 = vmatprep.subr.bf16.mxu0 0
  %102 = vmatpush1.bf16.msra.mxu0 0
  %103 = vmatprep.subr.bf16.mxu0 0
  %104 = vmatpush1.bf16.msra.mxu0 0
  %105 = vmatprep.subr.bf16.mxu0 0
  %106 = vmatpush1.bf16.msra.mxu0 0
  %107 = vmatprep.subr.bf16.mxu0 0
  %108 = vmatpush1.bf16.msra.mxu0 0
  %109 = vmatprep.subr.bf16.mxu0 0
  %110 = vmatpush1.bf16.msra.mxu0 0
  %111 = vmatprep.subr.bf16.mxu0 0
  %112 = vmatpush1.bf16.msra.mxu0 0
  %113 = vmatprep.subr.bf16.mxu0 0
  %114 = vmatpush1.bf16.msra.mxu0 0
  %115 = vmatprep.subr.bf16.mxu0 0
  %116 = vmatpush1.bf16.msra.mxu0 0
  %117 = vmatprep.subr.bf16.mxu0 0
  %118 = vmatpush1.bf16.msra.mxu0 0
  %119 = vmatprep.subr.bf16.mxu0 0
  %120 = vmatpush1.bf16.msra.mxu0 0
  %121 = vmatprep.mubr.bf16.mxu0 0
  %122 = vmatmul.mubr.bf16.gmra.mrb[0].mxu0 %v75
  %v123 = vpop.f32.mrb[0].mxu0
  %v124 = vadd.f32 %v34, %v123
  %v125 = vpop.f32.mrb[0].mxu0
  %v126 = vpop.f32.mrb[0].mxu0
  %v127 = vadd.f32 %v34, %v126
  %v128 = vpop.f32.mrb[0].mxu0
  %129 = vmatprep.mubr.bf16.mxu0 0
  %130 = vmatmul.mubr.bf16.gmra.mrb[0].mxu0 %v78
  %v131 = vpop.f32.mrb[0].mxu0
  %v132 = vadd.f32 %v34, %v131
  %v133 = vpop.f32.mrb[0].mxu0
  %v134 = vpop.f32.mrb[0].mxu0
  %v135 = vadd.f32 %v34, %v134
  %v136 = vpop.f32.mrb[0].mxu0
  %137 = vmatprep.mubr.bf16.mxu0 0
  %138 = vmatmul.mubr.bf16.gmra.mrb[0].mxu0 %v81
  %v139 = vpop.f32.mrb[0].mxu0
  %v140 = vadd.f32 %v34, %v139
  %v141 = vpop.f32.mrb[0].mxu0
  %v142 = vpop.f32.mrb[0].mxu0
  %v143 = vadd.f32 %v34, %v142
  %v144 = vpop.f32.mrb[0].mxu0
  %145 = vmatprep.mubr.bf16.mxu0 0
  %146 = vmatmul.mubr.bf16.gmra.mrb[0].mxu0 %v84
  %v147 = vpop.f32.mrb[0].mxu0
  %v148 = vadd.f32 %v34, %v147
  %v149 = vpop.f32.mrb[0].mxu0
  %v150 = vpop.f32.mrb[0].mxu0
  %v151 = vadd.f32 %v34, %v150
  %v152 = vpop.f32.mrb[0].mxu0
  %153 = vmatprep.mubr.bf16.mxu0 0
  %154 = vmatmul.mubr.bf16.gmra.mrb[0].mxu0 %v87
  %v155 = vpop.f32.mrb[0].mxu0
  %v156 = vadd.f32 %v34, %v155
  %v157 = vpop.f32.mrb[0].mxu0
  %v158 = vpop.f32.mrb[0].mxu0
  %v159 = vadd.f32 %v34, %v158
  %v160 = vpop.f32.mrb[0].mxu0
  %161 = vdwg.mxu0
  %v162 = vpack.c.bf16 %v127, %v124
  %v163 = vpack.c.bf16 %v135, %v132
  %v164 = vpack.c.bf16 %v143, %v140
  %v165 = vpack.c.bf16 %v151, %v148
  %v166 = vpack.c.bf16 %v159, %v156
  %v172 = vunpack.c.l.b16 %v162
  %v173 = vunpack.c.h.b16 %v162
  %v174 = vunpack.c.l.b16 %v163
  %v175 = vunpack.c.h.b16 %v163
  %v176 = vunpack.c.l.b16 %v164
  %v177 = vunpack.c.h.b16 %v164
  %v178 = vunpack.c.l.b16 %v165
  %v179 = vunpack.c.h.b16 %v165
  %v180 = vunpack.c.l.b16 %v166
  %v181 = vunpack.c.h.b16 %v166
  %v182 = vpack.c.b16 %v172, %v172
  %v183 = vpack.c.b16 %v173, %v173
  %v184 = vpack.c.b16 %v174, %v174
  %v185 = vpack.c.b16 %v175, %v175
  %v186 = vpack.c.b16 %v176, %v176
  %v187 = vpack.c.b16 %v177, %v177
  %v188 = vpack.c.b16 %v178, %v178
  %v189 = vpack.c.b16 %v179, %v179
  %v190 = vpack.c.b16 %v180, %v180
  %v191 = vpack.c.b16 %v181, %v181
  %vm202 = vcmask 781312
  %203 = vst.msk [vmem:[%s3] sm:$0xf] %vm202, %v182
  %204 = vst.msk [vmem:[%s3 + $0x4] sm:$0xf] %vm202, %v183
  %205 = vst.msk [vmem:[%s3 + $0x8] sm:$0xf] %vm202, %v184
  %206 = vst.msk [vmem:[%s3 + $0xc] sm:$0xf] %vm202, %v185
  %207 = vst.msk [vmem:[%s3 + $0x10] sm:$0xf] %vm202, %v186
  %208 = vst.msk [vmem:[%s3 + $0x14] sm:$0xf] %vm202, %v187
  %209 = vst.msk [vmem:[%s3 + $0x18] sm:$0xf] %vm202, %v188
  %210 = vst.msk [vmem:[%s3 + $0x1c] sm:$0xf] %vm202, %v189
  %211 = vst.msk [vmem:[%s3 + $0x20] sm:$0xf] %vm202, %v190
  %212 = vst.msk [vmem:[%s3 + $0x24] sm:$0xf] %vm202, %v191
  // Predicated region
  $region14: #{bert_mc_forward.13} parent=0 // pred_check
    _
  $region15: #{bert_mc_forward.13} parent=0 // pred_check_branch
    %214 = sbr.rel (0) target = $region17
  $region16: #{bert_mc_forward.13} parent=0 // pred_region
    _
  $region17: #{bert_mc_forward.13} parent=0 // pred_fallthru
    _
  // Predicated region
  $region18: #{bert_mc_forward.13} parent=0 // pred_check
    _
  $region19: #{bert_mc_forward.13} parent=0 // pred_check_branch
    %216 = sbr.rel (0) target = $region21
  $region20: #{bert_mc_forward.13} parent=0 // pred_region
    _
  $region21: #{bert_mc_forward.13} parent=0 // pred_fallthru
    _

// kernel: bert_mc_forward.12
$region0: #{bert_mc_forward.12}
  #allocation0 [shape = 'u32[]', space=smem, size = 0x4, offset = 0x4, fixed_abs, tag = 'smem constant byte address 0x4 - core index']
  #allocation1 [shape = 'u32[144,128]{1,0:T(1,128)}', space=vmem, size = 0x12000, scoped, tag = 'internal scratch']
  %s0 = inlined_call_operand.vmem [shape: f32[80,32], index: 0, kind: input, shape index: {}]
  %s1 = inlined_call_operand.vmem [shape: f32[1,32], index: 1, kind: input, shape index: {}]
  %s2 = inlined_call_operand.vmem [shape: f32[1,32], index: 2, kind: input, shape index: {}]
  %s3 = inlined_call_operand.vmem [shape: bf16[80,32], index: 3, kind: output, shape index: {}]
  %s4 = sld [smem:[#allocation0]]
  $region22: #{bert_mc_forward.12} parent=0
    _
  %s6 = ssub.s32 1, %s4
  %s7 = scalar_select 0, %s6, %s4
  // Predicated region
  $region2: #{bert_mc_forward.12} parent=0 // pred_check
    _
  $region3: #{bert_mc_forward.12} parent=0 // pred_check_branch
    %9 = sbr.rel (0) target = $region5
  $region4: #{bert_mc_forward.12} parent=0 // pred_region
    _
  $region5: #{bert_mc_forward.12} parent=0 // pred_fallthru
    _
  // Predicated region
  $region6: #{bert_mc_forward.12} parent=0 // pred_check
    _
  $region7: #{bert_mc_forward.12} parent=0 // pred_check_branch
    %11 = sbr.rel (0) target = $region9
  $region8: #{bert_mc_forward.12} parent=0 // pred_region
    _
  $region9: #{bert_mc_forward.12} parent=0 // pred_fallthru
    _
  // Predicated region
  $region10: #{bert_mc_forward.12} parent=0 // pred_check
    _
  $region11: #{bert_mc_forward.12} parent=0 // pred_check_branch
    %13 = sbr.rel (0) target = $region13
  $region12: #{bert_mc_forward.12} parent=0 // pred_region
    _
  $region13: #{bert_mc_forward.12} parent=0 // pred_fallthru
    _
  %v14 = vld [vmem:[%s0] sm:$0xff]
  %v15 = vld [vmem:[%s0 + $0x8] sm:$0xff]
  %v16 = vld [vmem:[%s0 + $0x10] sm:$0xff]
  %v17 = vld [vmem:[%s0 + $0x18] sm:$0xff]
  %v18 = vld [vmem:[%s0 + $0x20] sm:$0xff]
  %v19 = vld [vmem:[%s0 + $0x28] sm:$0xff]
  %v20 = vld [vmem:[%s0 + $0x30] sm:$0xff]
  %v21 = vld [vmem:[%s0 + $0x38] sm:$0xff]
  %v22 = vld [vmem:[%s0 + $0x40] sm:$0xff]
  %v23 = vld [vmem:[%s0 + $0x48] sm:$0xff]
  %v24 = vld [vmem:[%s1] sm:$0x1]
  %v25 = vld [vmem:[%s2] sm:$0x1]
  %vm26 = vcmask 261120
  %v27 = vsel %vm26, %v14, 0.0
  %28 = vadd.xlane.f32.xlu0 %v27
  %v29 = vpop.xlane.xlu0 %28
  %v30 = vsel %vm26, %v15, 0.0
  %31 = vadd.xlane.f32.xlu0 %v30
  %v32 = vpop.xlane.xlu0 %31
  %v33 = vsel %vm26, %v16, 0.0
  %34 = vadd.xlane.f32.xlu0 %v33
  %v35 = vpop.xlane.xlu0 %34
  %v36 = vsel %vm26, %v17, 0.0
  %37 = vadd.xlane.f32.xlu0 %v36
  %v38 = vpop.xlane.xlu0 %37
  %v39 = vsel %vm26, %v18, 0.0
  %40 = vadd.xlane.f32.xlu0 %v39
  %v41 = vpop.xlane.xlu0 %40
  %v42 = vsel %vm26, %v19, 0.0
  %43 = vadd.xlane.f32.xlu0 %v42
  %v44 = vpop.xlane.xlu0 %43
  %v45 = vsel %vm26, %v20, 0.0
  %46 = vadd.xlane.f32.xlu0 %v45
  %v47 = vpop.xlane.xlu0 %46
  %v48 = vsel %vm26, %v21, 0.0
  %49 = vadd.xlane.f32.xlu0 %v48
  %v50 = vpop.xlane.xlu0 %49
  %v51 = vsel %vm26, %v22, 0.0
  %52 = vadd.xlane.f32.xlu0 %v51
  %v53 = vpop.xlane.xlu0 %52
  %v54 = vsel %vm26, %v23, 0.0
  %55 = vadd.xlane.f32.xlu0 %v54
  %v56 = vpop.xlane.xlu0 %55
  %v57 = vrcp.pop 32.0
  %v58 = vmul.f32 %v29, %v57
  %v59 = vmul.f32 %v32, %v57
  %v60 = vmul.f32 %v35, %v57
  %v61 = vmul.f32 %v38, %v57
  %v62 = vmul.f32 %v41, %v57
  %v63 = vmul.f32 %v44, %v57
  %v64 = vmul.f32 %v47, %v57
  %v65 = vmul.f32 %v50, %v57
  %v66 = vmul.f32 %v53, %v57
  %v67 = vmul.f32 %v56, %v57
  %v68 = vsub.f32 %v14, %v58
  %v69 = vsub.f32 %v15, %v59
  %v70 = vsub.f32 %v16, %v60
  %v71 = vsub.f32 %v17, %v61
  %v72 = vsub.f32 %v18, %v62
  %v73 = vsub.f32 %v19, %v63
  %v74 = vsub.f32 %v20, %v64
  %v75 = vsub.f32 %v21, %v65
  %v76 = vsub.f32 %v22, %v66
  %v77 = vsub.f32 %v23, %v67
  %v78 = vmul.f32 %v68, %v68
  %v79 = vmul.f32 %v69, %v69
  %v80 = vmul.f32 %v70, %v70
  %v81 = vmul.f32 %v71, %v71
  %v82 = vmul.f32 %v72, %v72
  %v83 = vmul.f32 %v73, %v73
  %v84 = vmul.f32 %v74, %v74
  %v85 = vmul.f32 %v75, %v75
  %v86 = vmul.f32 %v76, %v76
  %v87 = vmul.f32 %v77, %v77
  %v88 = vsel %vm26, %v78, 0.0
  %89 = vadd.xlane.f32.xlu0 %v88
  %v90 = vpop.xlane.xlu0 %89
  %v91 = vsel %vm26, %v79, 0.0
  %92 = vadd.xlane.f32.xlu0 %v91
  %v93 = vpop.xlane.xlu0 %92
  %v94 = vsel %vm26, %v80, 0.0
  %95 = vadd.xlane.f32.xlu0 %v94
  %v96 = vpop.xlane.xlu0 %95
  %v97 = vsel %vm26, %v81, 0.0
  %98 = vadd.xlane.f32.xlu0 %v97
  %v99 = vpop.xlane.xlu0 %98
  %v100 = vsel %vm26, %v82, 0.0
  %101 = vadd.xlane.f32.xlu0 %v100
  %v102 = vpop.xlane.xlu0 %101
  %v103 = vsel %vm26, %v83, 0.0
  %104 = vadd.xlane.f32.xlu0 %v103
  %v105 = vpop.xlane.xlu0 %104
  %v106 = vsel %vm26, %v84, 0.0
  %107 = vadd.xlane.f32.xlu0 %v106
  %v108 = vpop.xlane.xlu0 %107
  %v109 = vsel %vm26, %v85, 0.0
  %110 = vadd.xlane.f32.xlu0 %v109
  %v111 = vpop.xlane.xlu0 %110
  %v112 = vsel %vm26, %v86, 0.0
  %113 = vadd.xlane.f32.xlu0 %v112
  %v114 = vpop.xlane.xlu0 %113
  %v115 = vsel %vm26, %v87, 0.0
  %116 = vadd.xlane.f32.xlu0 %v115
  %v117 = vpop.xlane.xlu0 %116
  %v118 = vmul.f32 %v90, %v57
  %v119 = vmul.f32 %v93, %v57
  %v120 = vmul.f32 %v96, %v57
  %v121 = vmul.f32 %v99, %v57
  %v122 = vmul.f32 %v102, %v57
  %v123 = vmul.f32 %v105, %v57
  %v124 = vmul.f32 %v108, %v57
  %v125 = vmul.f32 %v111, %v57
  %v126 = vmul.f32 %v114, %v57
  %v127 = vmul.f32 %v117, %v57
  %v128 = vadd.f32 %v118, 1e-12
  %v129 = vadd.f32 %v119, 1e-12
  %v130 = vadd.f32 %v120, 1e-12
  %v131 = vadd.f32 %v121, 1e-12
  %v132 = vadd.f32 %v122, 1e-12
  %v133 = vadd.f32 %v123, 1e-12
  %v134 = vadd.f32 %v124, 1e-12
  %v135 = vadd.f32 %v125, 1e-12
  %v136 = vadd.f32 %v126, 1e-12
  %v137 = vadd.f32 %v127, 1e-12
  %v138 = vrsqrt.pop %v128
  %v139 = vrsqrt.pop %v129
  %v140 = vrsqrt.pop %v130
  %v141 = vrsqrt.pop %v131
  %v142 = vrsqrt.pop %v132
  %v143 = vrsqrt.pop %v133
  %v144 = vrsqrt.pop %v134
  %v145 = vrsqrt.pop %v135
  %v146 = vrsqrt.pop %v136
  %v147 = vrsqrt.pop %v137
  %v148 = vmul.f32 %v68, %v138
  %v149 = vmul.f32 %v69, %v139
  %v150 = vmul.f32 %v70, %v140
  %v151 = vmul.f32 %v71, %v141
  %v152 = vmul.f32 %v72, %v142
  %v153 = vmul.f32 %v73, %v143
  %v154 = vmul.f32 %v74, %v144
  %v155 = vmul.f32 %v75, %v145
  %v156 = vmul.f32 %v76, %v146
  %v157 = vmul.f32 %v77, %v147
  %v159 = vlaneseq
  %v160 = vshrl.u32 %v159, 7
  %v161 = vsub.s32 0, %v160
  %v162 = vrot.slane %v24, %v161
  %v164 = vmul.f32 %v148, %v162
  %v165 = vmul.f32 %v149, %v162
  %v166 = vmul.f32 %v150, %v162
  %v167 = vmul.f32 %v151, %v162
  %v168 = vmul.f32 %v152, %v162
  %v169 = vmul.f32 %v153, %v162
  %v170 = vmul.f32 %v154, %v162
  %v171 = vmul.f32 %v155, %v162
  %v172 = vmul.f32 %v156, %v162
  %v173 = vmul.f32 %v157, %v162
  %v175 = vlaneseq
  %v176 = vshrl.u32 %v175, 7
  %v177 = vsub.s32 0, %v176
  %v178 = vrot.slane %v25, %v177
  %v180 = vadd.f32 %v164, %v178
  %v181 = vadd.f32 %v165, %v178
  %v182 = vadd.f32 %v166, %v178
  %v183 = vadd.f32 %v167, %v178
  %v184 = vadd.f32 %v168, %v178
  %v185 = vadd.f32 %v169, %v178
  %v186 = vadd.f32 %v170, %v178
  %v187 = vadd.f32 %v171, %v178
  %v188 = vadd.f32 %v172, %v178
  %v189 = vadd.f32 %v173, %v178
  %v190 = vpack.c.bf16 %v181, %v180
  %v191 = vpack.c.bf16 %v183, %v182
  %v192 = vpack.c.bf16 %v185, %v184
  %v193 = vpack.c.bf16 %v187, %v186
  %v194 = vpack.c.bf16 %v189, %v188
  %v200 = vunpack.c.l.b16 %v190
  %v201 = vunpack.c.h.b16 %v190
  %v202 = vunpack.c.l.b16 %v191
  %v203 = vunpack.c.h.b16 %v191
  %v204 = vunpack.c.l.b16 %v192
  %v205 = vunpack.c.h.b16 %v192
  %v206 = vunpack.c.l.b16 %v193
  %v207 = vunpack.c.h.b16 %v193
  %v208 = vunpack.c.l.b16 %v194
  %v209 = vunpack.c.h.b16 %v194
  %v210 = vpack.c.b16 %v200, %v200
  %v211 = vpack.c.b16 %v201, %v201
  %v212 = vpack.c.b16 %v202, %v202
  %v213 = vpack.c.b16 %v203, %v203
  %v214 = vpack.c.b16 %v204, %v204
  %v215 = vpack.c.b16 %v205, %v205
  %v216 = vpack.c.b16 %v206, %v206
  %v217 = vpack.c.b16 %v207, %v207
  %v218 = vpack.c.b16 %v208, %v208
  %v219 = vpack.c.b16 %v209, %v209
  %vm230 = vcmask 257024
  %231 = vst.msk [vmem:[%s3] sm:$0xf] %vm230, %v210
  %232 = vst.msk [vmem:[%s3 + $0x4] sm:$0xf] %vm230, %v211
  %233 = vst.msk [vmem:[%s3 + $0x8] sm:$0xf] %vm230, %v212
  %234 = vst.msk [vmem:[%s3 + $0xc] sm:$0xf] %vm230, %v213
  %235 = vst.msk [vmem:[%s3 + $0x10] sm:$0xf] %vm230, %v214
  %236 = vst.msk [vmem:[%s3 + $0x14] sm:$0xf] %vm230, %v215
  %237 = vst.msk [vmem:[%s3 + $0x18] sm:$0xf] %vm230, %v216
  %238 = vst.msk [vmem:[%s3 + $0x1c] sm:$0xf] %vm230, %v217
  %239 = vst.msk [vmem:[%s3 + $0x20] sm:$0xf] %vm230, %v218
  %240 = vst.msk [vmem:[%s3 + $0x24] sm:$0xf] %vm230, %v219
  // Predicated region
  $region14: #{bert_mc_forward.12} parent=0 // pred_check
    _
  $region15: #{bert_mc_forward.12} parent=0 // pred_check_branch
    %242 = sbr.rel (0) target = $region17
  $region16: #{bert_mc_forward.12} parent=0 // pred_region
    _
  $region17: #{bert_mc_forward.12} parent=0 // pred_fallthru
    _
  // Predicated region
  $region18: #{bert_mc_forward.12} parent=0 // pred_check
    _
  $region19: #{bert_mc_forward.12} parent=0 // pred_check_branch
    %244 = sbr.rel (0) target = $region21
  $region20: #{bert_mc_forward.12} parent=0 // pred_region
    _
  $region21: #{bert_mc_forward.12} parent=0 // pred_fallthru
    _

// kernel: bert_mc_forward.14
$region0: #{bert_mc_forward.14}
  #allocation0 [shape = 'u32[]', space=smem, size = 0x4, offset = 0x4, fixed_abs, tag = 'smem constant byte address 0x4 - core index']
  #allocation1 [shape = 'u32[144,128]{1,0:T(1,128)}', space=vmem, size = 0x12000, scoped, tag = 'internal scratch']
  %s0 = inlined_call_operand.vmem [shape: bf16[10,8,96], index: 0, kind: input, shape index: {}]
  %s1 = inlined_call_operand.vmem [shape: f32[10,1,8], index: 1, kind: input, shape index: {}]
  %s2 = inlined_call_operand.vmem [shape: bf16[10,8,32], index: 2, kind: output, shape index: {}]
  %s3 = sld [smem:[#allocation0]]
  $region41: #{bert_mc_forward.14} parent=0
    _
  %s5 = ssub.s32 1, %s3
  %s6 = scalar_select 0, %s5, %s3
  loop: start=0, step=1, limit=12
  $region2: #{bert_mc_forward.14} parent=0 // loop_pre_header
    _
  $region3: #{bert_mc_forward.14} parent=0 // loop_header
    %s8 = sphi 0, %s12
    %p9 = scmp.ge.s32.totalorder %s8, 12
    %s18 = sphi 0, %s20
    %s21 = sphi 0, %s18
    %s22 = sphi 0, %s21
    %s38 = sphi 0, %s22
    %s44 = sphi 0, %s46
    %s47 = sphi 0, %s44
    %s48 = sphi 0, %s47
    %s64 = sphi 0, %s48
    %s70 = sphi 0, %s72
    %s73 = sphi 0, %s70
    %s74 = sphi 0, %s73
    %s90 = sphi 0, %s74
  $region4: #{bert_mc_forward.14} parent=0 // loop_header_branch
    %11 = sbr.rel (%p9) target = $region8
  $region5: #{bert_mc_forward.14} parent=0 // loop_body
    %s13 = ssub.s32 %s8, 1
    %s14 = ssub.s32 %s8, 2
    %s15 = sadd.s32 %s8, 1
    %s16 = ssub.s32 %s8, %s15
    %p17 = scmp.eq.s32.totalorder %s16, 0
    %s19 = sadd.s32 %s18, 1
    %s20 = scalar_select %p17, %s18, %s19
    %p23 = pneg %p17
    %p24 = scmp.eq.s32.totalorder %s8, 9
    %p25 = por %p23, %p24
    %p26 = scmp.ne.s32.totalorder %s18, %s21
    %p27 = scmp.eq.s32.totalorder %s8, 0
    %p28 = por %p26, %p27
    %p29 = scmp.ne.s32.totalorder %s18, %s21
    %p30 = scmp.eq.s32.totalorder %s13, 9
    %p31 = por %p29, %p30
    %p32 = scmp.ne.s32.totalorder %s21, %s22
    %p33 = scmp.eq.s32.totalorder %s13, 0
    %p34 = por %p32, %p33
    %p35 = scmp.ne.s32.totalorder %s21, %s22
    %p36 = scmp.eq.s32.totalorder %s14, 9
    %p37 = por %p35, %p36
    %p39 = scmp.ne.s32.totalorder %s22, %s38
    %p40 = scmp.eq.s32.totalorder %s14, 0
    %p41 = por %p39, %p40
    %s42 = ssub.s32 %s8, %s15
    %p43 = scmp.eq.s32.totalorder %s42, 0
    %s45 = sadd.s32 %s44, 1
    %s46 = scalar_select %p43, %s44, %s45
    %p49 = pneg %p43
    %p50 = scmp.eq.s32.totalorder %s8, 9
    %p51 = por %p49, %p50
    %p52 = scmp.ne.s32.totalorder %s44, %s47
    %p53 = scmp.eq.s32.totalorder %s8, 0
    %p54 = por %p52, %p53
    %p55 = scmp.ne.s32.totalorder %s44, %s47
    %p56 = scmp.eq.s32.totalorder %s13, 9
    %p57 = por %p55, %p56
    %p58 = scmp.ne.s32.totalorder %s47, %s48
    %p59 = scmp.eq.s32.totalorder %s13, 0
    %p60 = por %p58, %p59
    %p61 = scmp.ne.s32.totalorder %s47, %s48
    %p62 = scmp.eq.s32.totalorder %s14, 9
    %p63 = por %p61, %p62
    %p65 = scmp.ne.s32.totalorder %s48, %s64
    %p66 = scmp.eq.s32.totalorder %s14, 0
    %p67 = por %p65, %p66
    %s68 = ssub.s32 %s8, %s15
    %p69 = scmp.eq.s32.totalorder %s68, 0
    %s71 = sadd.s32 %s70, 1
    %s72 = scalar_select %p69, %s70, %s71
    %p75 = pneg %p69
    %p76 = scmp.eq.s32.totalorder %s8, 9
    %p77 = por %p75, %p76
    %p78 = scmp.ne.s32.totalorder %s70, %s73
    %p79 = scmp.eq.s32.totalorder %s8, 0
    %p80 = por %p78, %p79
    %p81 = scmp.ne.s32.totalorder %s70, %s73
    %p82 = scmp.eq.s32.totalorder %s13, 9
    %p83 = por %p81, %p82
    %p84 = scmp.ne.s32.totalorder %s73, %s74
    %p85 = scmp.eq.s32.totalorder %s13, 0
    %p86 = por %p84, %p85
    %p87 = scmp.ne.s32.totalorder %s73, %s74
    %p88 = scmp.eq.s32.totalorder %s14, 9
    %p89 = por %p87, %p88
    %p91 = scmp.ne.s32.totalorder %s74, %s90
    %p92 = scmp.eq.s32.totalorder %s14, 0
    %p93 = por %p91, %p92
    %p94 = scmp.le.s32.totalorder 1, %s8
    %p95 = scmp.lt.s32.totalorder %s8, 11
    %p96 = pnand %p94, %p95
    %p97 = pneg %p96
    // Predicated region
    $region9: #{bert_mc_forward.14} parent=5 // pred_check
      _
    $region10: #{bert_mc_forward.14} parent=5 // pred_check_branch
      %99 = sbr.rel (%p96) target = $region12
    $region11: #{bert_mc_forward.14} parent=5 // pred_region
      %s100 = ssub.s32 %s8, 1
    $region12: #{bert_mc_forward.14} parent=5 // pred_fallthru
      _
    %p101 = scmp.lt.s32.totalorder %s8, 10
    // Predicated region
    $region13: #{bert_mc_forward.14} parent=5 // pred_check
      %p102 = pneg %p101
    $region14: #{bert_mc_forward.14} parent=5 // pred_check_branch
      %104 = sbr.rel (%p102) target = $region16
    $region15: #{bert_mc_forward.14} parent=5 // pred_region
      // Predicated region
      $region17: #{bert_mc_forward.14} parent=15 // pred_check
        %p105 = pneg %p28
      $region18: #{bert_mc_forward.14} parent=15 // pred_check_branch
        %107 = sbr.rel (%p105) target = $region20
      $region19: #{bert_mc_forward.14} parent=15 // pred_region
        %p108 = scmp.lt.s32.totalorder %s8, 9
        %s109 = scalar_select %p108, %s8, 9
        %s110 = smul.addr %s109, 4
        %s111 = scalar_lea.vmem %s0, %s110
      $region20: #{bert_mc_forward.14} parent=15 // pred_fallthru
        _
      // Predicated region
      $region21: #{bert_mc_forward.14} parent=15 // pred_check
        %p112 = pneg %p54
      $region22: #{bert_mc_forward.14} parent=15 // pred_check_branch
        %114 = sbr.rel (%p112) target = $region24
      $region23: #{bert_mc_forward.14} parent=15 // pred_region
        %p115 = scmp.lt.s32.totalorder %s8, 9
        %s116 = scalar_select %p115, %s8, 9
        %s117 = scalar_lea.vmem %s1, %s116
      $region24: #{bert_mc_forward.14} parent=15 // pred_fallthru
        _
    $region16: #{bert_mc_forward.14} parent=5 // pred_fallthru
      _
    %p118 = scmp.le.s32.totalorder 1, %s8
    %p119 = scmp.lt.s32.totalorder %s8, 11
    %p120 = pnand %p118, %p119
    %p121 = pneg %p120
    // Predicated region
    $region25: #{bert_mc_forward.14} parent=5 // pred_check
      _
    $region26: #{bert_mc_forward.14} parent=5 // pred_check_branch
      %123 = sbr.rel (%p120) target = $region28
    $region27: #{bert_mc_forward.14} parent=5 // pred_region
      %s124 = ssub.s32 %s8, 1
      %p125 = scmp.lt.s32.totalorder %s13, 9
      %s126 = scalar_select %p125, %s13, 9
      %s127 = smul.addr %s126, 4
      %s128 = scalar_lea.vmem %s0, %s127
      %p129 = pneg %p34
      %p130 = pneg %p31
      %p131 = scmp.lt.s32.totalorder %s13, 9
      %s132 = scalar_select %p131, %s13, 9
      %s133 = scalar_lea.vmem %s1, %s132
      %p134 = pneg %p60
      %p135 = pneg %p57
      %p136 = pneg %p86
      %p137 = pneg %p83
      %p138 = scmp.lt.s32.totalorder %s13, 9
      %s139 = scalar_select %p138, %s13, 9
      %s140 = smul.addr %s139, 4
      %s141 = scalar_lea.vmem %s2, %s140
      %p142 = scmp.lt.s32.totalorder %s13, 9
      %s143 = scalar_select %p142, %s13, 9
      %s144 = smul.addr %s143, 4
      %s145 = scalar_lea.vmem %s0, %s144
      %p146 = scmp.lt.s32.totalorder %s13, 9
      %s147 = scalar_select %p146, %s13, 9
      %s148 = scalar_lea.vmem %s1, %s147
      %p149 = scmp.lt.s32.totalorder %s13, 9
      %s150 = scalar_select %p149, %s13, 9
      %s151 = smul.addr %s150, 4
      %s152 = scalar_lea.vmem %s2, %s151
      %v154 = vld [vmem:[%s148] sm:$0x1]
      %v155 = vld [vmem:[%s145] sm:$0xf]
      %v157 = vlaneseq
      %v158 = vshrl.u32 %v157, 7
      %v159 = vsub.s32 0, %v158
      %v160 = vrot.slane %v154, %v159
      %v163 = vunpack.c.l.b16 %v155
      %v164 = vpack.c.b16 %v163, %v163
      %165 = vrot.lane.b32.xlu0 %v164, 96
      %v166 = vpop.permute.xlu0 %165
      %vm167 = vcmask 130048
      %v169 = vsel %vm167, %v155, 0
      %v172 = vsel %vm167, %v166, 0
      %174 = vmatprep.subr.bf16.mxu0 0
      %175 = vmatpush1.bf16.xpose.msra.mxu0 %v172
      %176 = vmatprep.subr.bf16.mxu0 0
      %177 = vmatpush1.bf16.xpose.msra.mxu0 0
      %178 = vmatprep.subr.bf16.mxu0 0
      %179 = vmatpush1.bf16.xpose.msra.mxu0 0
      %180 = vmatprep.subr.bf16.mxu0 0
      %181 = vmatpush1.bf16.xpose.msra.mxu0 0
      %182 = vmatprep.subr.bf16.mxu0 0
      %183 = vmatpush1.bf16.xpose.msra.mxu0 0
      %184 = vmatprep.subr.bf16.mxu0 0
      %185 = vmatpush1.bf16.xpose.msra.mxu0 0
      %186 = vmatprep.subr.bf16.mxu0 0
      %187 = vmatpush1.bf16.xpose.msra.mxu0 0
      %188 = vmatprep.subr.bf16.mxu0 0
      %189 = vmatpush1.bf16.xpose.msra.mxu0 0
      %190 = vmatprep.subr.bf16.mxu0 0
      %191 = vmatpush1.bf16.xpose.msra.mxu0 0
      %192 = vmatprep.subr.bf16.mxu0 0
      %193 = vmatpush1.bf16.xpose.msra.mxu0 0
      %194 = vmatprep.subr.bf16.mxu0 0
      %195 = vmatpush1.bf16.xpose.msra.mxu0 0
      %196 = vmatprep.subr.bf16.mxu0 0
      %197 = vmatpush1.bf16.xpose.msra.mxu0 0
      %198 = vmatprep.subr.bf16.mxu0 0
      %199 = vmatpush1.bf16.xpose.msra.mxu0 0
      %200 = vmatprep.subr.bf16.mxu0 0
      %201 = vmatpush1.bf16.xpose.msra.mxu0 0
      %202 = vmatprep.subr.bf16.mxu0 0
      %203 = vmatpush1.bf16.xpose.msra.mxu0 0
      %204 = vmatprep.subr.bf16.mxu0 0
      %205 = vmatpush1.bf16.xpose.msra.mxu0 0
      %206 = vmatprep.mubr.bf16.mxu0 0
      %207 = vmatmul.mubr.bf16.gmra.mrb[0].mxu0 %v169
      %v208 = vpop.f32.mrb[0].mxu0
      %v209 = vadd.f32 %v160, %v208
      %v210 = vpop.f32.mrb[0].mxu0
      %v211 = vpop.f32.mrb[0].mxu0
      %v212 = vpop.f32.mrb[0].mxu0
      %213 = vdwg.mxu0
      %vm214 = vcmask 64512
      %v215 = vsel %vm214, %v209, -inf
      %216 = vmax.xlane.f32.xlu0 %v215
      %v217 = vpop.xlane.xlu0 %216
      %v218 = vsub.f32 %v209, %v217
      %v219 = vmul.f32 %v218, 1.442695
      %v220 = vpow.pop %v219
      %v221 = vsel %vm214, %v220, 0.0
      %222 = vadd.xlane.f32.xlu0 %v221
      %v223 = vpop.xlane.xlu0 %222
      %v224 = vrcp.pop %v223
      %v225 = vmul.f32 %v220, %v224
      %v226 = vpack.c.bf16 %v225, %v225
      %227 = vrot.lane.b32.xlu0 %v164, 64
      %v228 = vpop.permute.xlu0 %227
      %v230 = vsel %vm214, %v226, 0
      %vm232 = vcmask 1043456
      %v234 = vsel %vm232, %v228, 0
      %236 = vmatprep.subr.bf16.mxu0 0
      %237 = vmatpush1.bf16.msra.mxu0 %v234
      %238 = vmatprep.subr.bf16.mxu0 0
      %239 = vmatpush1.bf16.msra.mxu0 0
      %240 = vmatprep.subr.bf16.mxu0 0
      %241 = vmatpush1.bf16.msra.mxu0 0
      %242 = vmatprep.subr.bf16.mxu0 0
      %243 = vmatpush1.bf16.msra.mxu0 0
      %244 = vmatprep.subr.bf16.mxu0 0
      %245 = vmatpush1.bf16.msra.mxu0 0
      %246 = vmatprep.subr.bf16.mxu0 0
      %247 = vmatpush1.bf16.msra.mxu0 0
      %248 = vmatprep.subr.bf16.mxu0 0
      %249 = vmatpush1.bf16.msra.mxu0 0
      %250 = vmatprep.subr.bf16.mxu0 0
      %251 = vmatpush1.bf16.msra.mxu0 0
      %252 = vmatprep.subr.bf16.mxu0 0
      %253 = vmatpush1.bf16.msra.mxu0 0
      %254 = vmatprep.subr.bf16.mxu0 0
      %255 = vmatpush1.bf16.msra.mxu0 0
      %256 = vmatprep.subr.bf16.mxu0 0
      %257 = vmatpush1.bf16.msra.mxu0 0
      %258 = vmatprep.subr.bf16.mxu0 0
      %259 = vmatpush1.bf16.msra.mxu0 0
      %260 = vmatprep.subr.bf16.mxu0 0
      %261 = vmatpush1.bf16.msra.mxu0 0
      %262 = vmatprep.subr.bf16.mxu0 0
      %263 = vmatpush1.bf16.msra.mxu0 0
      %264 = vmatprep.subr.bf16.mxu0 0
      %265 = vmatpush1.bf16.msra.mxu0 0
      %266 = vmatprep.subr.bf16.mxu0 0
      %267 = vmatpush1.bf16.msra.mxu0 0
      %268 = vmatprep.mubr.bf16.mxu0 0
      %269 = vmatmul.mubr.bf16.gmra.mrb[0].mxu0 %v230
      %v270 = vpop.f32.mrb[0].mxu0
      %v271 = vadd.f32 0.0, %v270
      %v272 = vpop.f32.mrb[0].mxu0
      %v273 = vpop.f32.mrb[0].mxu0
      %v274 = vpop.f32.mrb[0].mxu0
      %275 = vdwg.mxu0
      %276 = vrot.lane.b32.xlu0 %v164, 112
      %v277 = vpop.permute.xlu0 %276
      %278 = vrot.lane.b32.xlu0 %v164, 80
      %v279 = vpop.permute.xlu0 %278
      %v281 = vsel %vm167, %v277, 0
      %v284 = vsel %vm167, %v279, 0
      %286 = vmatprep.subr.bf16.mxu0 0
      %287 = vmatpush1.bf16.xpose.msra.mxu0 %v284
      %288 = vmatprep.subr.bf16.mxu0 0
      %289 = vmatpush1.bf16.xpose.msra.mxu0 0
      %290 = vmatprep.subr.bf16.mxu0 0
      %291 = vmatpush1.bf16.xpose.msra.mxu0 0
      %292 = vmatprep.subr.bf16.mxu0 0
      %293 = vmatpush1.bf16.xpose.msra.mxu0 0
      %294 = vmatprep.subr.bf16.mxu0 0
      %295 = vmatpush1.bf16.xpose.msra.mxu0 0
      %296 = vmatprep.subr.bf16.mxu0 0
      %297 = vmatpush1.bf16.xpose.msra.mxu0 0
      %298 = vmatprep.subr.bf16.mxu0 0
      %299 = vmatpush1.bf16.xpose.msra.mxu0 0
      %300 = vmatprep.subr.bf16.mxu0 0
      %301 = vmatpush1.bf16.xpose.msra.mxu0 0
      %302 = vmatprep.subr.bf16.mxu0 0
      %303 = vmatpush1.bf16.xpose.msra.mxu0 0
      %304 = vmatprep.subr.bf16.mxu0 0
      %305 = vmatpush1.bf16.xpose.msra.mxu0 0
      %306 = vmatprep.subr.bf16.mxu0 0
      %307 = vmatpush1.bf16.xpose.msra.mxu0 0
      %308 = vmatprep.subr.bf16.mxu0 0
      %309 = vmatpush1.bf16.xpose.msra.mxu0 0
      %310 = vmatprep.subr.bf16.mxu0 0
      %311 = vmatpush1.bf16.xpose.msra.mxu0 0
      %312 = vmatprep.subr.bf16.mxu0 0
      %313 = vmatpush1.bf16.xpose.msra.mxu0 0
      %314 = vmatprep.subr.bf16.mxu0 0
      %315 = vmatpush1.bf16.xpose.msra.mxu0 0
      %316 = vmatprep.subr.bf16.mxu0 0
      %317 = vmatpush1.bf16.xpose.msra.mxu0 0
      %318 = vmatprep.mubr.bf16.mxu0 0
      %319 = vmatmul.mubr.bf16.gmra.mrb[0].mxu0 %v281
      %v320 = vpop.f32.mrb[0].mxu0
      %v321 = vadd.f32 %v160, %v320
      %v322 = vpop.f32.mrb[0].mxu0
      %v323 = vpop.f32.mrb[0].mxu0
      %v324 = vpop.f32.mrb[0].mxu0
      %325 = vdwg.mxu0
      %v326 = vsel %vm214, %v321, -inf
      %327 = vmax.xlane.f32.xlu0 %v326
      %v328 = vpop.xlane.xlu0 %327
      %v329 = vsub.f32 %v321, %v328
      %v330 = vmul.f32 %v329, 1.442695
      %v331 = vpow.pop %v330
      %v332 = vsel %vm214, %v331, 0.0
      %333 = vadd.xlane.f32.xlu0 %v332
      %v334 = vpop.xlane.xlu0 %333
      %v335 = vrcp.pop %v334
      %v336 = vmul.f32 %v331, %v335
      %v337 = vpack.c.bf16 %v336, %v336
      %338 = vrot.lane.b32.xlu0 %v164, 48
      %v339 = vpop.permute.xlu0 %338
      %v341 = vsel %vm214, %v337, 0
      %v344 = vsel %vm232, %v339, 0
      %346 = vmatprep.subr.bf16.mxu0 0
      %347 = vmatpush1.bf16.msra.mxu0 %v344
      %348 = vmatprep.subr.bf16.mxu0 0
      %349 = vmatpush1.bf16.msra.mxu0 0
      %350 = vmatprep.subr.bf16.mxu0 0
      %351 = vmatpush1.bf16.msra.mxu0 0
      %352 = vmatprep.subr.bf16.mxu0 0
      %353 = vmatpush1.bf16.msra.mxu0 0
      %354 = vmatprep.subr.bf16.mxu0 0
      %355 = vmatpush1.bf16.msra.mxu0 0
      %356 = vmatprep.subr.bf16.mxu0 0
      %357 = vmatpush1.bf16.msra.mxu0 0
      %358 = vmatprep.subr.bf16.mxu0 0
      %359 = vmatpush1.bf16.msra.mxu0 0
      %360 = vmatprep.subr.bf16.mxu0 0
      %361 = vmatpush1.bf16.msra.mxu0 0
      %362 = vmatprep.subr.bf16.mxu0 0
      %363 = vmatpush1.bf16.msra.mxu0 0
      %364 = vmatprep.subr.bf16.mxu0 0
      %365 = vmatpush1.bf16.msra.mxu0 0
      %366 = vmatprep.subr.bf16.mxu0 0
      %367 = vmatpush1.bf16.msra.mxu0 0
      %368 = vmatprep.subr.bf16.mxu0 0
      %369 = vmatpush1.bf16.msra.mxu0 0
      %370 = vmatprep.subr.bf16.mxu0 0
      %371 = vmatpush1.bf16.msra.mxu0 0
      %372 = vmatprep.subr.bf16.mxu0 0
      %373 = vmatpush1.bf16.msra.mxu0 0
      %374 = vmatprep.subr.bf16.mxu0 0
      %375 = vmatpush1.bf16.msra.mxu0 0
      %376 = vmatprep.subr.bf16.mxu0 0
      %377 = vmatpush1.bf16.msra.mxu0 0
      %378 = vmatprep.mubr.bf16.mxu0 0
      %379 = vmatmul.mubr.bf16.gmra.mrb[0].mxu0 %v341
      %v380 = vpop.f32.mrb[0].mxu0
      %v381 = vadd.f32 0.0, %v380
      %v382 = vpop.f32.mrb[0].mxu0
      %v383 = vpop.f32.mrb[0].mxu0
      %v384 = vpop.f32.mrb[0].mxu0
      %385 = vdwg.mxu0
      %387 = vrot.lane.b32.xlu0 %v381, 16
      %v388 = vpop.permute.xlu0 %387
      %v390 = vsel %vm167, %v271, %v388
      %v391 = vpack.c.bf16 %v390, %v390
      %vm392 = vcmask 257024
      %393 = vst.msk [vmem:[%s152] sm:$0xf] %vm392, %v391
      %p394 = scmp.lt.s32.totalorder %s13, 9
      %s395 = scalar_select %p394, %s13, 9
      %s396 = smul.addr %s395, 4
      %s397 = scalar_lea.vmem %s2, %s396
      // Predicated region
      $region29: #{bert_mc_forward.14} parent=27 // pred_check
        %p398 = pneg %p83
      $region30: #{bert_mc_forward.14} parent=27 // pred_check_branch
        %400 = sbr.rel (%p398) target = $region32
      $region31: #{bert_mc_forward.14} parent=27 // pred_region
        _
      $region32: #{bert_mc_forward.14} parent=27 // pred_fallthru
        _
    $region28: #{bert_mc_forward.14} parent=5 // pred_fallthru
      _
    %p401 = scmp.le.s32.totalorder 2, %s8
    // Predicated region
    $region33: #{bert_mc_forward.14} parent=5 // pred_check
      %p402 = pneg %p401
    $region34: #{bert_mc_forward.14} parent=5 // pred_check_branch
      %404 = sbr.rel (%p402) target = $region36
    $region35: #{bert_mc_forward.14} parent=5 // pred_region
      %s405 = ssub.s32 %s8, 2
      // Predicated region
      $region37: #{bert_mc_forward.14} parent=35 // pred_check
        %p406 = pneg %p89
      $region38: #{bert_mc_forward.14} parent=35 // pred_check_branch
        %408 = sbr.rel (%p406) target = $region40
      $region39: #{bert_mc_forward.14} parent=35 // pred_region
        %p409 = scmp.lt.s32.totalorder %s14, 9
        %s410 = scalar_select %p409, %s14, 9
        %s411 = smul.addr %s410, 4
        %s412 = scalar_lea.vmem %s2, %s411
      $region40: #{bert_mc_forward.14} parent=35 // pred_fallthru
        _
    $region36: #{bert_mc_forward.14} parent=5 // pred_fallthru
      _
  $region6: #{bert_mc_forward.14} parent=0 // loop_footer
    %s12 = sadd.s32 1, %s8
  $region7: #{bert_mc_forward.14} parent=0 // loop_footer_branch
    %7 = sbr.rel target = $region3
  $region8: #{bert_mc_forward.14} parent=0 // loop_exit
    _

// kernel: bert_mc_forward.15
$region0: #{bert_mc_forward.15}
  #allocation0 [shape = 'u32[]', space=smem, size = 0x4, offset = 0x4, fixed_abs, tag = 'smem constant byte address 0x4 - core index']
  #allocation1 [shape = 'u32[144,128]{1,0:T(1,128)}', space=vmem, size = 0x12000, scoped, tag = 'internal scratch']
  %s0 = inlined_call_operand.vmem [shape: bf16[80,32], index: 0, kind: input, shape index: {}]
  %s1 = inlined_call_operand.vmem [shape: bf16[32,32], index: 1, kind: input, shape index: {}]
  %s2 = inlined_call_operand.vmem [shape: f32[1,32], index: 2, kind: input, shape index: {}]
  %s3 = inlined_call_operand.vmem [shape: bf16[80,32], index: 3, kind: input, shape index: {}]
  %s4 = inlined_call_operand.vmem [shape: f32[1,32], index: 4, kind: input, shape index: {}]
  %s5 = inlined_call_operand.vmem [shape: f32[1,32], index: 5, kind: input, shape index: {}]
  %s6 = inlined_call_operand.vmem [shape: bf16[80,32], index: 6, kind: output, shape index: {}]
  %s7 = sld [smem:[#allocation0]]
  $region34: #{bert_mc_forward.15} parent=0
    _
  %s9 = ssub.s32 1, %s7
  %s10 = scalar_select 0, %s9, %s7
  // Predicated region
  $region2: #{bert_mc_forward.15} parent=0 // pred_check
    _
  $region3: #{bert_mc_forward.15} parent=0 // pred_check_branch
    %12 = sbr.rel (0) target = $region5
  $region4: #{bert_mc_forward.15} parent=0 // pred_region
    _
  $region5: #{bert_mc_forward.15} parent=0 // pred_fallthru
    _
  // Predicated region
  $region6: #{bert_mc_forward.15} parent=0 // pred_check
    _
  $region7: #{bert_mc_forward.15} parent=0 // pred_check_branch
    %14 = sbr.rel (0) target = $region9
  $region8: #{bert_mc_forward.15} parent=0 // pred_region
    _
  $region9: #{bert_mc_forward.15} parent=0 // pred_fallthru
    _
  // Predicated region
  $region10: #{bert_mc_forward.15} parent=0 // pred_check
    _
  $region11: #{bert_mc_forward.15} parent=0 // pred_check_branch
    %16 = sbr.rel (0) target = $region13
  $region12: #{bert_mc_forward.15} parent=0 // pred_region
    _
  $region13: #{bert_mc_forward.15} parent=0 // pred_fallthru
    _
  // Predicated region
  $region14: #{bert_mc_forward.15} parent=0 // pred_check
    _
  $region15: #{bert_mc_forward.15} parent=0 // pred_check_branch
    %18 = sbr.rel (0) target = $region17
  $region16: #{bert_mc_forward.15} parent=0 // pred_region
    _
  $region17: #{bert_mc_forward.15} parent=0 // pred_fallthru
    _
  // Predicated region
  $region18: #{bert_mc_forward.15} parent=0 // pred_check
    _
  $region19: #{bert_mc_forward.15} parent=0 // pred_check_branch
    %20 = sbr.rel (0) target = $region21
  $region20: #{bert_mc_forward.15} parent=0 // pred_region
    _
  $region21: #{bert_mc_forward.15} parent=0 // pred_fallthru
    _
  // Predicated region
  $region22: #{bert_mc_forward.15} parent=0 // pred_check
    _
  $region23: #{bert_mc_forward.15} parent=0 // pred_check_branch
    %22 = sbr.rel (0) target = $region25
  $region24: #{bert_mc_forward.15} parent=0 // pred_region
    _
  $region25: #{bert_mc_forward.15} parent=0 // pred_fallthru
    _
  %v24 = vld [vmem:[%s0] sm:$0xf]
  %v25 = vld [vmem:[%s0 + $0x4] sm:$0xf]
  %v26 = vld [vmem:[%s0 + $0x8] sm:$0xf]
  %v27 = vld [vmem:[%s0 + $0xc] sm:$0xf]
  %v28 = vld [vmem:[%s0 + $0x10] sm:$0xf]
  %v29 = vld [vmem:[%s0 + $0x14] sm:$0xf]
  %v30 = vld [vmem:[%s0 + $0x18] sm:$0xf]
  %v31 = vld [vmem:[%s0 + $0x1c] sm:$0xf]
  %v32 = vld [vmem:[%s0 + $0x20] sm:$0xf]
  %v33 = vld [vmem:[%s0 + $0x24] sm:$0xf]
  %v34 = vld [vmem:[%s1] sm:$0xf]
  %v35 = vld [vmem:[%s1 + $0x4] sm:$0xf]
  %v36 = vld [vmem:[%s1 + $0x8] sm:$0xf]
  %v37 = vld [vmem:[%s1 + $0xc] sm:$0xf]
  %v38 = vld [vmem:[%s2] sm:$0x1]
  %v40 = vlaneseq
  %v41 = vshrl.u32 %v40, 7
  %v42 = vsub.s32 0, %v41
  %v43 = vrot.slane %v38, %v42
  %v55 = vunpack.c.l.b16 %v24
  %v56 = vunpack.c.l.b16 %v25
  %v57 = vunpack.c.l.b16 %v26
  %v58 = vunpack.c.l.b16 %v27
  %v59 = vunpack.c.l.b16 %v28
  %v60 = vunpack.c.l.b16 %v29
  %v61 = vunpack.c.l.b16 %v30
  %v62 = vunpack.c.l.b16 %v31
  %v63 = vunpack.c.l.b16 %v32
  %v64 = vunpack.c.l.b16 %v33
  %v65 = vpack.c.b16 %v56, %v55
  %v66 = vpack.c.b16 %v58, %v57
  %v67 = vpack.c.b16 %v60, %v59
  %v68 = vpack.c.b16 %v62, %v61
  %v69 = vpack.c.b16 %v64, %v63
  %v74 = vunpack.c.l.b16 %v34
  %v75 = vunpack.c.l.b16 %v35
  %v76 = vunpack.c.l.b16 %v36
  %v77 = vunpack.c.l.b16 %v37
  %v78 = vpack.c.b16 %v75, %v74
  %v79 = vpack.c.b16 %v77, %v76
  %vm82 = vcmask 261120
  %v84 = vsel %vm82, %v65, 0
  %v87 = vsel %vm82, %v66, 0
  %v90 = vsel %vm82, %v67, 0
  %v93 = vsel %vm82, %v68, 0
  %v96 = vsel %vm82, %v69, 0
  %98 = vmatprep.subr.bf16.mxu0 0
  %99 = vmatpush1.bf16.msra.mxu0 %v78
  %100 = vmatprep.subr.bf16.mxu0 0
  %101 = vmatpush1.bf16.msra.mxu0 %v79
  %102 = vmatprep.subr.bf16.mxu0 0
  %103 = vmatpush1.bf16.msra.mxu0 0
  %104 = vmatprep.subr.bf16.mxu0 0
  %105 = vmatpush1.bf16.msra.mxu0 0
  %106 = vmatprep.subr.bf16.mxu0 0
  %107 = vmatpush1.bf16.msra.mxu0 0
  %108 = vmatprep.subr.bf16.mxu0 0
  %109 = vmatpush1.bf16.msra.mxu0 0
  %110 = vmatprep.subr.bf16.mxu0 0
  %111 = vmatpush1.bf16.msra.mxu0 0
  %112 = vmatprep.subr.bf16.mxu0 0
  %113 = vmatpush1.bf16.msra.mxu0 0
  %114 = vmatprep.subr.bf16.mxu0 0
  %115 = vmatpush1.bf16.msra.mxu0 0
  %116 = vmatprep.subr.bf16.mxu0 0
  %117 = vmatpush1.bf16.msra.mxu0 0
  %118 = vmatprep.subr.bf16.mxu0 0
  %119 = vmatpush1.bf16.msra.mxu0 0
  %120 = vmatprep.subr.bf16.mxu0 0
  %121 = vmatpush1.bf16.msra.mxu0 0
  %122 = vmatprep.subr.bf16.mxu0 0
  %123 = vmatpush1.bf16.msra.mxu0 0
  %124 = vmatprep.subr.bf16.mxu0 0
  %125 = vmatpush1.bf16.msra.mxu0 0
  %126 = vmatprep.subr.bf16.mxu0 0
  %127 = vmatpush1.bf16.msra.mxu0 0
  %128 = vmatprep.subr.bf16.mxu0 0
  %129 = vmatpush1.bf16.msra.mxu0 0
  %130 = vmatprep.mubr.bf16.mxu0 0
  %131 = vmatmul.mubr.bf16.gmra.mrb[0].mxu0 %v84
  %v132 = vpop.f32.mrb[0].mxu0
  %v133 = vadd.f32 %v43, %v132
  %v134 = vpop.f32.mrb[0].mxu0
  %v135 = vpop.f32.mrb[0].mxu0
  %v136 = vadd.f32 %v43, %v135
  %v137 = vpop.f32.mrb[0].mxu0
  %138 = vmatprep.mubr.bf16.mxu0 0
  %139 = vmatmul.mubr.bf16.gmra.mrb[0].mxu0 %v87
  %v140 = vpop.f32.mrb[0].mxu0
  %v141 = vadd.f32 %v43, %v140
  %v142 = vpop.f32.mrb[0].mxu0
  %v143 = vpop.f32.mrb[0].mxu0
  %v144 = vadd.f32 %v43, %v143
  %v145 = vpop.f32.mrb[0].mxu0
  %146 = vmatprep.mubr.bf16.mxu0 0
  %147 = vmatmul.mubr.bf16.gmra.mrb[0].mxu0 %v90
  %v148 = vpop.f32.mrb[0].mxu0
  %v149 = vadd.f32 %v43, %v148
  %v150 = vpop.f32.mrb[0].mxu0
  %v151 = vpop.f32.mrb[0].mxu0
  %v152 = vadd.f32 %v43, %v151
  %v153 = vpop.f32.mrb[0].mxu0
  %154 = vmatprep.mubr.bf16.mxu0 0
  %155 = vmatmul.mubr.bf16.gmra.mrb[0].mxu0 %v93
  %v156 = vpop.f32.mrb[0].mxu0
  %v157 = vadd.f32 %v43, %v156
  %v158 = vpop.f32.mrb[0].mxu0
  %v159 = vpop.f32.mrb[0].mxu0
  %v160 = vadd.f32 %v43, %v159
  %v161 = vpop.f32.mrb[0].mxu0
  %162 = vmatprep.mubr.bf16.mxu0 0
  %163 = vmatmul.mubr.bf16.gmra.mrb[0].mxu0 %v96
  %v164 = vpop.f32.mrb[0].mxu0
  %v165 = vadd.f32 %v43, %v164
  %v166 = vpop.f32.mrb[0].mxu0
  %v167 = vpop.f32.mrb[0].mxu0
  %v168 = vadd.f32 %v43, %v167
  %v169 = vpop.f32.mrb[0].mxu0
  %170 = vdwg.mxu0
  %v171 = vld [vmem:[%s3] sm:$0xf]
  %v172 = vld [vmem:[%s3 + $0x4] sm:$0xf]
  %v173 = vld [vmem:[%s3 + $0x8] sm:$0xf]
  %v174 = vld [vmem:[%s3 + $0xc] sm:$0xf]
  %v175 = vld [vmem:[%s3 + $0x10] sm:$0xf]
  %v176 = vld [vmem:[%s3 + $0x14] sm:$0xf]
  %v177 = vld [vmem:[%s3 + $0x18] sm:$0xf]
  %v178 = vld [vmem:[%s3 + $0x1c] sm:$0xf]
  %v179 = vld [vmem:[%s3 + $0x20] sm:$0xf]
  %v180 = vld [vmem:[%s3 + $0x24] sm:$0xf]
  %v181 = vunpack.c.l.bf16 %v171
  %v182 = vunpack.c.l.bf16 %v172
  %v183 = vunpack.c.l.bf16 %v173
  %v184 = vunpack.c.l.bf16 %v174
  %v185 = vunpack.c.l.bf16 %v175
  %v186 = vunpack.c.l.bf16 %v176
  %v187 = vunpack.c.l.bf16 %v177
  %v188 = vunpack.c.l.bf16 %v178
  %v189 = vunpack.c.l.bf16 %v179
  %v190 = vunpack.c.l.bf16 %v180
  %v191 = vadd.f32 %v133, %v181
  %v192 = vadd.f32 %v136, %v182
  %v193 = vadd.f32 %v141, %v183
  %v194 = vadd.f32 %v144, %v184
  %v195 = vadd.f32 %v149, %v185
  %v196 = vadd.f32 %v152, %v186
  %v197 = vadd.f32 %v157, %v187
  %v198 = vadd.f32 %v160, %v188
  %v199 = vadd.f32 %v165, %v189
  %v200 = vadd.f32 %v168, %v190
  %v201 = vld [vmem:[%s4] sm:$0x1]
  %v202 = vld [vmem:[%s5] sm:$0x1]
  %v203 = vsel %vm82, %v191, 0.0
  %204 = vadd.xlane.f32.xlu0 %v203
  %v205 = vpop.xlane.xlu0 %204
  %v206 = vsel %vm82, %v192, 0.0
  %207 = vadd.xlane.f32.xlu0 %v206
  %v208 = vpop.xlane.xlu0 %207
  %v209 = vsel %vm82, %v193, 0.0
  %210 = vadd.xlane.f32.xlu0 %v209
  %v211 = vpop.xlane.xlu0 %210
  %v212 = vsel %vm82, %v194, 0.0
  %213 = vadd.xlane.f32.xlu0 %v212
  %v214 = vpop.xlane.xlu0 %213
  %v215 = vsel %vm82, %v195, 0.0
  %216 = vadd.xlane.f32.xlu0 %v215
  %v217 = vpop.xlane.xlu0 %216
  %v218 = vsel %vm82, %v196, 0.0
  %219 = vadd.xlane.f32.xlu0 %v218
  %v220 = vpop.xlane.xlu0 %219
  %v221 = vsel %vm82, %v197, 0.0
  %222 = vadd.xlane.f32.xlu0 %v221
  %v223 = vpop.xlane.xlu0 %222
  %v224 = vsel %vm82, %v198, 0.0
  %225 = vadd.xlane.f32.xlu0 %v224
  %v226 = vpop.xlane.xlu0 %225
  %v227 = vsel %vm82, %v199, 0.0
  %228 = vadd.xlane.f32.xlu0 %v227
  %v229 = vpop.xlane.xlu0 %228
  %v230 = vsel %vm82, %v200, 0.0
  %231 = vadd.xlane.f32.xlu0 %v230
  %v232 = vpop.xlane.xlu0 %231
  %v233 = vrcp.pop 32.0
  %v234 = vmul.f32 %v205, %v233
  %v235 = vmul.f32 %v208, %v233
  %v236 = vmul.f32 %v211, %v233
  %v237 = vmul.f32 %v214, %v233
  %v238 = vmul.f32 %v217, %v233
  %v239 = vmul.f32 %v220, %v233
  %v240 = vmul.f32 %v223, %v233
  %v241 = vmul.f32 %v226, %v233
  %v242 = vmul.f32 %v229, %v233
  %v243 = vmul.f32 %v232, %v233
  %v244 = vsub.f32 %v191, %v234
  %v245 = vsub.f32 %v192, %v235
  %v246 = vsub.f32 %v193, %v236
  %v247 = vsub.f32 %v194, %v237
  %v248 = vsub.f32 %v195, %v238
  %v249 = vsub.f32 %v196, %v239
  %v250 = vsub.f32 %v197, %v240
  %v251 = vsub.f32 %v198, %v241
  %v252 = vsub.f32 %v199, %v242
  %v253 = vsub.f32 %v200, %v243
  %v254 = vmul.f32 %v244, %v244
  %v255 = vmul.f32 %v245, %v245
  %v256 = vmul.f32 %v246, %v246
  %v257 = vmul.f32 %v247, %v247
  %v258 = vmul.f32 %v248, %v248
  %v259 = vmul.f32 %v249, %v249
  %v260 = vmul.f32 %v250, %v250
  %v261 = vmul.f32 %v251, %v251
  %v262 = vmul.f32 %v252, %v252
  %v263 = vmul.f32 %v253, %v253
  %v264 = vsel %vm82, %v254, 0.0
  %265 = vadd.xlane.f32.xlu0 %v264
  %v266 = vpop.xlane.xlu0 %265
  %v267 = vsel %vm82, %v255, 0.0
  %268 = vadd.xlane.f32.xlu0 %v267
  %v269 = vpop.xlane.xlu0 %268
  %v270 = vsel %vm82, %v256, 0.0
  %271 = vadd.xlane.f32.xlu0 %v270
  %v272 = vpop.xlane.xlu0 %271
  %v273 = vsel %vm82, %v257, 0.0
  %274 = vadd.xlane.f32.xlu0 %v273
  %v275 = vpop.xlane.xlu0 %274
  %v276 = vsel %vm82, %v258, 0.0
  %277 = vadd.xlane.f32.xlu0 %v276
  %v278 = vpop.xlane.xlu0 %277
  %v279 = vsel %vm82, %v259, 0.0
  %280 = vadd.xlane.f32.xlu0 %v279
  %v281 = vpop.xlane.xlu0 %280
  %v282 = vsel %vm82, %v260, 0.0
  %283 = vadd.xlane.f32.xlu0 %v282
  %v284 = vpop.xlane.xlu0 %283
  %v285 = vsel %vm82, %v261, 0.0
  %286 = vadd.xlane.f32.xlu0 %v285
  %v287 = vpop.xlane.xlu0 %286
  %v288 = vsel %vm82, %v262, 0.0
  %289 = vadd.xlane.f32.xlu0 %v288
  %v290 = vpop.xlane.xlu0 %289
  %v291 = vsel %vm82, %v263, 0.0
  %292 = vadd.xlane.f32.xlu0 %v291
  %v293 = vpop.xlane.xlu0 %292
  %v294 = vmul.f32 %v266, %v233
  %v295 = vmul.f32 %v269, %v233
  %v296 = vmul.f32 %v272, %v233
  %v297 = vmul.f32 %v275, %v233
  %v298 = vmul.f32 %v278, %v233
  %v299 = vmul.f32 %v281, %v233
  %v300 = vmul.f32 %v284, %v233
  %v301 = vmul.f32 %v287, %v233
  %v302 = vmul.f32 %v290, %v233
  %v303 = vmul.f32 %v293, %v233
  %v304 = vadd.f32 %v294, 1e-12
  %v305 = vadd.f32 %v295, 1e-12
  %v306 = vadd.f32 %v296, 1e-12
  %v307 = vadd.f32 %v297, 1e-12
  %v308 = vadd.f32 %v298, 1e-12
  %v309 = vadd.f32 %v299, 1e-12
  %v310 = vadd.f32 %v300, 1e-12
  %v311 = vadd.f32 %v301, 1e-12
  %v312 = vadd.f32 %v302, 1e-12
  %v313 = vadd.f32 %v303, 1e-12
  %v314 = vrsqrt.pop %v304
  %v315 = vrsqrt.pop %v305
  %v316 = vrsqrt.pop %v306
  %v317 = vrsqrt.pop %v307
  %v318 = vrsqrt.pop %v308
  %v319 = vrsqrt.pop %v309
  %v320 = vrsqrt.pop %v310
  %v321 = vrsqrt.pop %v311
  %v322 = vrsqrt.pop %v312
  %v323 = vrsqrt.pop %v313
  %v324 = vmul.f32 %v244, %v314
  %v325 = vmul.f32 %v245, %v315
  %v326 = vmul.f32 %v246, %v316
  %v327 = vmul.f32 %v247, %v317
  %v328 = vmul.f32 %v248, %v318
  %v329 = vmul.f32 %v249, %v319
  %v330 = vmul.f32 %v250, %v320
  %v331 = vmul.f32 %v251, %v321
  %v332 = vmul.f32 %v252, %v322
  %v333 = vmul.f32 %v253, %v323
  %v335 = vlaneseq
  %v336 = vshrl.u32 %v335, 7
  %v337 = vsub.s32 0, %v336
  %v338 = vrot.slane %v201, %v337
  %v340 = vmul.f32 %v324, %v338
  %v341 = vmul.f32 %v325, %v338
  %v342 = vmul.f32 %v326, %v338
  %v343 = vmul.f32 %v327, %v338
  %v344 = vmul.f32 %v328, %v338
  %v345 = vmul.f32 %v329, %v338
  %v346 = vmul.f32 %v330, %v338
  %v347 = vmul.f32 %v331, %v338
  %v348 = vmul.f32 %v332, %v338
  %v349 = vmul.f32 %v333, %v338
  %v351 = vlaneseq
  %v352 = vshrl.u32 %v351, 7
  %v353 = vsub.s32 0, %v352
  %v354 = vrot.slane %v202, %v353
  %v356 = vadd.f32 %v340, %v354
  %v357 = vadd.f32 %v341, %v354
  %v358 = vadd.f32 %v342, %v354
  %v359 = vadd.f32 %v343, %v354
  %v360 = vadd.f32 %v344, %v354
  %v361 = vadd.f32 %v345, %v354
  %v362 = vadd.f32 %v346, %v354
  %v363 = vadd.f32 %v347, %v354
  %v364 = vadd.f32 %v348, %v354
  %v365 = vadd.f32 %v349, %v354
  %v366 = vpack.c.bf16 %v357, %v356
  %v367 = vpack.c.bf16 %v359, %v358
  %v368 = vpack.c.bf16 %v361, %v360
  %v369 = vpack.c.bf16 %v363, %v362
  %v370 = vpack.c.bf16 %v365, %v364
  %v376 = vunpack.c.l.b16 %v366
  %v377 = vunpack.c.h.b16 %v366
  %v378 = vunpack.c.l.b16 %v367
  %v379 = vunpack.c.h.b16 %v367
  %v380 = vunpack.c.l.b16 %v368
  %v381 = vunpack.c.h.b16 %v368
  %v382 = vunpack.c.l.b16 %v369
  %v383 = vunpack.c.h.b16 %v369
  %v384 = vunpack.c.l.b16 %v370
  %v385 = vunpack.c.h.b16 %v370
  %v386 = vpack.c.b16 %v376, %v376
  %v387 = vpack.c.b16 %v377, %v377
  %v388 = vpack.c.b16 %v378, %v378
  %v389 = vpack.c.b16 %v379, %v379
  %v390 = vpack.c.b16 %v380, %v380
  %v391 = vpack.c.b16 %v381, %v381
  %v392 = vpack.c.b16 %v382, %v382
  %v393 = vpack.c.b16 %v383, %v383
  %v394 = vpack.c.b16 %v384, %v384
  %v395 = vpack.c.b16 %v385, %v385
  %vm406 = vcmask 257024
  %407 = vst.msk [vmem:[%s6] sm:$0xf] %vm406, %v386
  %408 = vst.msk [vmem:[%s6 + $0x4] sm:$0xf] %vm406, %v387
  %409 = vst.msk [vmem:[%s6 + $0x8] sm:$0xf] %vm406, %v388
  %410 = vst.msk [vmem:[%s6 + $0xc] sm:$0xf] %vm406, %v389
  %411 = vst.msk [vmem:[%s6 + $0x10] sm:$0xf] %vm406, %v390
  %412 = vst.msk [vmem:[%s6 + $0x14] sm:$0xf] %vm406, %v391
  %413 = vst.msk [vmem:[%s6 + $0x18] sm:$0xf] %vm406, %v392
  %414 = vst.msk [vmem:[%s6 + $0x1c] sm:$0xf] %vm406, %v393
  %415 = vst.msk [vmem:[%s6 + $0x20] sm:$0xf] %vm406, %v394
  %416 = vst.msk [vmem:[%s6 + $0x24] sm:$0xf] %vm406, %v395
  // Predicated region
  $region26: #{bert_mc_forward.15} parent=0 // pred_check
    _
  $region27: #{bert_mc_forward.15} parent=0 // pred_check_branch
    %418 = sbr.rel (0) target = $region29
  $region28: #{bert_mc_forward.15} parent=0 // pred_region
    _
  $region29: #{bert_mc_forward.15} parent=0 // pred_fallthru
    _
  // Predicated region
  $region30: #{bert_mc_forward.15} parent=0 // pred_check
    _
  $region31: #{bert_mc_forward.15} parent=0 // pred_check_branch
    %420 = sbr.rel (0) target = $region33
  $region32: #{bert_mc_forward.15} parent=0 // pred_region
    _
  $region33: #{bert_mc_forward.15} parent=0 // pred_fallthru
    _

// kernel: bert_mc_forward.16
$region0: #{bert_mc_forward.16}
  #allocation0 [shape = 'u32[]', space=smem, size = 0x4, offset = 0x4, fixed_abs, tag = 'smem constant byte address 0x4 - core index']
  #allocation1 [shape = 'u32[144,128]{1,0:T(1,128)}', space=vmem, size = 0x12000, scoped, tag = 'internal scratch']
  %s0 = inlined_call_operand.vmem [shape: bf16[80,32], index: 0, kind: input, shape index: {}]
  %s1 = inlined_call_operand.vmem [shape: bf16[32,64], index: 1, kind: input, shape index: {}]
  %s2 = inlined_call_operand.vmem [shape: f32[1,64], index: 2, kind: input, shape index: {}]
  %s3 = inlined_call_operand.vmem [shape: bf16[80,64], index: 3, kind: output, shape index: {}]
  %s4 = sld [smem:[#allocation0]]
  $region22: #{bert_mc_forward.16} parent=0
    _
  %s6 = ssub.s32 1, %s4
  %s7 = scalar_select 0, %s6, %s4
  // Predicated region
  $region2: #{bert_mc_forward.16} parent=0 // pred_check
    _
  $region3: #{bert_mc_forward.16} parent=0 // pred_check_branch
    %9 = sbr.rel (0) target = $region5
  $region4: #{bert_mc_forward.16} parent=0 // pred_region
    _
  $region5: #{bert_mc_forward.16} parent=0 // pred_fallthru
    _
  // Predicated region
  $region6: #{bert_mc_forward.16} parent=0 // pred_check
    _
  $region7: #{bert_mc_forward.16} parent=0 // pred_check_branch
    %11 = sbr.rel (0) target = $region9
  $region8: #{bert_mc_forward.16} parent=0 // pred_region
    _
  $region9: #{bert_mc_forward.16} parent=0 // pred_fallthru
    _
  // Predicated region
  $region10: #{bert_mc_forward.16} parent=0 // pred_check
    _
  $region11: #{bert_mc_forward.16} parent=0 // pred_check_branch
    %13 = sbr.rel (0) target = $region13
  $region12: #{bert_mc_forward.16} parent=0 // pred_region
    _
  $region13: #{bert_mc_forward.16} parent=0 // pred_fallthru
    _
  %v15 = vld [vmem:[%s0] sm:$0xf]
  %v16 = vld [vmem:[%s0 + $0x4] sm:$0xf]
  %v17 = vld [vmem:[%s0 + $0x8] sm:$0xf]
  %v18 = vld [vmem:[%s0 + $0xc] sm:$0xf]
  %v19 = vld [vmem:[%s0 + $0x10] sm:$0xf]
  %v20 = vld [vmem:[%s0 + $0x14] sm:$0xf]
  %v21 = vld [vmem:[%s0 + $0x18] sm:$0xf]
  %v22 = vld [vmem:[%s0 + $0x1c] sm:$0xf]
  %v23 = vld [vmem:[%s0 + $0x20] sm:$0xf]
  %v24 = vld [vmem:[%s0 + $0x24] sm:$0xf]
  %v25 = vld [vmem:[%s1] sm:$0xf]
  %v26 = vld [vmem:[%s1 + $0x4] sm:$0xf]
  %v27 = vld [vmem:[%s1 + $0x8] sm:$0xf]
  %v28 = vld [vmem:[%s1 + $0xc] sm:$0xf]
  %v29 = vld [vmem:[%s2] sm:$0x1]
  %v31 = vlaneseq
  %v32 = vshrl.u32 %v31, 7
  %v33 = vsub.s32 0, %v32
  %v34 = vrot.slane %v29, %v33
  %v46 = vunpack.c.l.b16 %v15
  %v47 = vunpack.c.l.b16 %v16
  %v48 = vunpack.c.l.b16 %v17
  %v49 = vunpack.c.l.b16 %v18
  %v50 = vunpack.c.l.b16 %v19
  %v51 = vunpack.c.l.b16 %v20
  %v52 = vunpack.c.l.b16 %v21
  %v53 = vunpack.c.l.b16 %v22
  %v54 = vunpack.c.l.b16 %v23
  %v55 = vunpack.c.l.b16 %v24
  %v56 = vpack.c.b16 %v47, %v46
  %v57 = vpack.c.b16 %v49, %v48
  %v58 = vpack.c.b16 %v51, %v50
  %v59 = vpack.c.b16 %v53, %v52
  %v60 = vpack.c.b16 %v55, %v54
  %v65 = vunpack.c.l.b16 %v25
  %v66 = vunpack.c.l.b16 %v26
  %v67 = vunpack.c.l.b16 %v27
  %v68 = vunpack.c.l.b16 %v28
  %v69 = vpack.c.b16 %v66, %v65
  %v70 = vpack.c.b16 %v68, %v67
  %vm73 = vcmask 261120
  %v75 = vsel %vm73, %v56, 0
  %v78 = vsel %vm73, %v57, 0
  %v81 = vsel %vm73, %v58, 0
  %v84 = vsel %vm73, %v59, 0
  %v87 = vsel %vm73, %v60, 0
  %89 = vmatprep.subr.bf16.mxu0 0
  %90 = vmatpush1.bf16.msra.mxu0 %v69
  %91 = vmatprep.subr.bf16.mxu0 0
  %92 = vmatpush1.bf16.msra.mxu0 %v70
  %93 = vmatprep.subr.bf16.mxu0 0
  %94 = vmatpush1.bf16.msra.mxu0 0
  %95 = vmatprep.subr.bf16.mxu0 0
  %96 = vmatpush1.bf16.msra.mxu0 0
  %97 = vmatprep.subr.bf16.mxu0 0
  %98 = vmatpush1.bf16.msra.mxu0 0
  %99 = vmatprep.subr.bf16.mxu0 0
  %100 = vmatpush1.bf16.msra.mxu0 0
  %101 = vmatprep.subr.bf16.mxu0 0
  %102 = vmatpush1.bf16.msra.mxu0 0
  %103 = vmatprep.subr.bf16.mxu0 0
  %104 = vmatpush1.bf16.msra.mxu0 0
  %105 = vmatprep.subr.bf16.mxu0 0
  %106 = vmatpush1.bf16.msra.mxu0 0
  %107 = vmatprep.subr.bf16.mxu0 0
  %108 = vmatpush1.bf16.msra.mxu0 0
  %109 = vmatprep.subr.bf16.mxu0 0
  %110 = vmatpush1.bf16.msra.mxu0 0
  %111 = vmatprep.subr.bf16.mxu0 0
  %112 = vmatpush1.bf16.msra.mxu0 0
  %113 = vmatprep.subr.bf16.mxu0 0
  %114 = vmatpush1.bf16.msra.mxu0 0
  %115 = vmatprep.subr.bf16.mxu0 0
  %116 = vmatpush1.bf16.msra.mxu0 0
  %117 = vmatprep.subr.bf16.mxu0 0
  %118 = vmatpush1.bf16.msra.mxu0 0
  %119 = vmatprep.subr.bf16.mxu0 0
  %120 = vmatpush1.bf16.msra.mxu0 0
  %121 = vmatprep.mubr.bf16.mxu0 0
  %122 = vmatmul.mubr.bf16.gmra.mrb[0].mxu0 %v75
  %v123 = vpop.f32.mrb[0].mxu0
  %v124 = vadd.f32 %v34, %v123
  %v125 = vpop.f32.mrb[0].mxu0
  %v126 = vpop.f32.mrb[0].mxu0
  %v127 = vadd.f32 %v34, %v126
  %v128 = vpop.f32.mrb[0].mxu0
  %129 = vmatprep.mubr.bf16.mxu0 0
  %130 = vmatmul.mubr.bf16.gmra.mrb[0].mxu0 %v78
  %v131 = vpop.f32.mrb[0].mxu0
  %v132 = vadd.f32 %v34, %v131
  %v133 = vpop.f32.mrb[0].mxu0
  %v134 = vpop.f32.mrb[0].mxu0
  %v135 = vadd.f32 %v34, %v134
  %v136 = vpop.f32.mrb[0].mxu0
  %137 = vmatprep.mubr.bf16.mxu0 0
  %138 = vmatmul.mubr.bf16.gmra.mrb[0].mxu0 %v81
  %v139 = vpop.f32.mrb[0].mxu0
  %v140 = vadd.f32 %v34, %v139
  %v141 = vpop.f32.mrb[0].mxu0
  %v142 = vpop.f32.mrb[0].mxu0
  %v143 = vadd.f32 %v34, %v142
  %v144 = vpop.f32.mrb[0].mxu0
  %145 = vmatprep.mubr.bf16.mxu0 0
  %146 = vmatmul.mubr.bf16.gmra.mrb[0].mxu0 %v84
  %v147 = vpop.f32.mrb[0].mxu0
  %v148 = vadd.f32 %v34, %v147
  %v149 = vpop.f32.mrb[0].mxu0
  %v150 = vpop.f32.mrb[0].mxu0
  %v151 = vadd.f32 %v34, %v150
  %v152 = vpop.f32.mrb[0].mxu0
  %153 = vmatprep.mubr.bf16.mxu0 0
  %154 = vmatmul.mubr.bf16.gmra.mrb[0].mxu0 %v87
  %v155 = vpop.f32.mrb[0].mxu0
  %v156 = vadd.f32 %v34, %v155
  %v157 = vpop.f32.mrb[0].mxu0
  %v158 = vpop.f32.mrb[0].mxu0
  %v159 = vadd.f32 %v34, %v158
  %v160 = vpop.f32.mrb[0].mxu0
  %161 = vdwg.mxu0
  %v162 = vmul.f32 %v124, 0.5
  %v163 = vmul.f32 %v127, 0.5
  %v164 = vmul.f32 %v132, 0.5
  %v165 = vmul.f32 %v135, 0.5
  %v166 = vmul.f32 %v140, 0.5
  %v167 = vmul.f32 %v143, 0.5
  %v168 = vmul.f32 %v148, 0.5
  %v169 = vmul.f32 %v151, 0.5
  %v170 = vmul.f32 %v156, 0.5
  %v171 = vmul.f32 %v159, 0.5
  %v172 = vmul.f32 %v124, 0.044715
  %v173 = vmul.f32 %v127, 0.044715
  %v174 = vmul.f32 %v132, 0.044715
  %v175 = vmul.f32 %v135, 0.044715
  %v176 = vmul.f32 %v140, 0.044715
  %v177 = vmul.f32 %v143, 0.044715
  %v178 = vmul.f32 %v148, 0.044715
  %v179 = vmul.f32 %v151, 0.044715
  %v180 = vmul.f32 %v156, 0.044715
  %v181 = vmul.f32 %v159, 0.044715
  %v182 = vmul.f32 %v172, %v124
  %v183 = vmul.f32 %v173, %v127
  %v184 = vmul.f32 %v174, %v132
  %v185 = vmul.f32 %v175, %v135
  %v186 = vmul.f32 %v176, %v140
  %v187 = vmul.f32 %v177, %v143
  %v188 = vmul.f32 %v178, %v148
  %v189 = vmul.f32 %v179, %v151
  %v190 = vmul.f32 %v180, %v156
  %v191 = vmul.f32 %v181, %v159
  %v192 = vmul.f32 %v182, %v124
  %v193 = vmul.f32 %v183, %v127
  %v194 = vmul.f32 %v184, %v132
  %v195 = vmul.f32 %v185, %v135
  %v196 = vmul.f32 %v186, %v140
  %v197 = vmul.f32 %v187, %v143
  %v198 = vmul.f32 %v188, %v148
  %v199 = vmul.f32 %v189, %v151
  %v200 = vmul.f32 %v190, %v156
  %v201 = vmul.f32 %v191, %v159
  %v202 = vadd.f32 %v124, %v192
  %v203 = vadd.f32 %v127, %v193
  %v204 = vadd.f32 %v132, %v194
  %v205 = vadd.f32 %v135, %v195
  %v206 = vadd.f32 %v140, %v196
  %v207 = vadd.f32 %v143, %v197
  %v208 = vadd.f32 %v148, %v198
  %v209 = vadd.f32 %v151, %v199
  %v210 = vadd.f32 %v156, %v200
  %v211 = vadd.f32 %v159, %v201
  %v212 = vmul.f32 %v202, 0.7978846
  %v213 = vmul.f32 %v203, 0.7978846
  %v214 = vmul.f32 %v204, 0.7978846
  %v215 = vmul.f32 %v205, 0.7978846
  %v216 = vmul.f32 %v206, 0.7978846
  %v217 = vmul.f32 %v207, 0.7978846
  %v218 = vmul.f32 %v208, 0.7978846
  %v219 = vmul.f32 %v209, 0.7978846
  %v220 = vmul.f32 %v210, 0.7978846
  %v221 = vmul.f32 %v211, 0.7978846
  %v222 = vtanh.pop %v212
  %v223 = vtanh.pop %v213
  %v224 = vtanh.pop %v214
  %v225 = vtanh.pop %v215
  %v226 = vtanh.pop %v216
  %v227 = vtanh.pop %v217
  %v228 = vtanh.pop %v218
  %v229 = vtanh.pop %v219
  %v230 = vtanh.pop %v220
  %v231 = vtanh.pop %v221
  %v232 = vadd.f32 %v222, 1.0
  %v233 = vadd.f32 %v223, 1.0
  %v234 = vadd.f32 %v224, 1.0
  %v235 = vadd.f32 %v225, 1.0
  %v236 = vadd.f32 %v226, 1.0
  %v237 = vadd.f32 %v227, 1.0
  %v238 = vadd.f32 %v228, 1.0
  %v239 = vadd.f32 %v229, 1.0
  %v240 = vadd.f32 %v230, 1.0
  %v241 = vadd.f32 %v231, 1.0
  %v242 = vmul.f32 %v162, %v232
  %v243 = vmul.f32 %v163, %v233
  %v244 = vmul.f32 %v164, %v234
  %v245 = vmul.f32 %v165, %v235
  %v246 = vmul.f32 %v166, %v236
  %v247 = vmul.f32 %v167, %v237
  %v248 = vmul.f32 %v168, %v238
  %v249 = vmul.f32 %v169, %v239
  %v250 = vmul.f32 %v170, %v240
  %v251 = vmul.f32 %v171, %v241
  %v252 = vpack.c.bf16 %v243, %v242
  %v253 = vpack.c.bf16 %v245, %v244
  %v254 = vpack.c.bf16 %v247, %v246
  %v255 = vpack.c.bf16 %v249, %v248
  %v256 = vpack.c.bf16 %v251, %v250
  %v262 = vunpack.c.l.b16 %v252
  %v263 = vunpack.c.h.b16 %v252
  %v264 = vunpack.c.l.b16 %v253
  %v265 = vunpack.c.h.b16 %v253
  %v266 = vunpack.c.l.b16 %v254
  %v267 = vunpack.c.h.b16 %v254
  %v268 = vunpack.c.l.b16 %v255
  %v269 = vunpack.c.h.b16 %v255
  %v270 = vunpack.c.l.b16 %v256
  %v271 = vunpack.c.h.b16 %v256
  %v272 = vpack.c.b16 %v262, %v262
  %v273 = vpack.c.b16 %v263, %v263
  %v274 = vpack.c.b16 %v264, %v264
  %v275 = vpack.c.b16 %v265, %v265
  %v276 = vpack.c.b16 %v266, %v266
  %v277 = vpack.c.b16 %v267, %v267
  %v278 = vpack.c.b16 %v268, %v268
  %v279 = vpack.c.b16 %v269, %v269
  %v280 = vpack.c.b16 %v270, %v270
  %v281 = vpack.c.b16 %v271, %v271
  %vm292 = vcmask 519168
  %293 = vst.msk [vmem:[%s3] sm:$0xf] %vm292, %v272
  %294 = vst.msk [vmem:[%s3 + $0x4] sm:$0xf] %vm292, %v273
  %295 = vst.msk [vmem:[%s3 + $0x8] sm:$0xf] %vm292, %v274
  %296 = vst.msk [vmem:[%s3 + $0xc] sm:$0xf] %vm292, %v275
  %297 = vst.msk [vmem:[%s3 + $0x10] sm:$0xf] %vm292, %v276
  %298 = vst.msk [vmem:[%s3 + $0x14] sm:$0xf] %vm292, %v277
  %299 = vst.msk [vmem:[%s3 + $0x18] sm:$0xf] %vm292, %v278
  %300 = vst.msk [vmem:[%s3 + $0x1c] sm:$0xf] %vm292, %v279
  %301 = vst.msk [vmem:[%s3 + $0x20] sm:$0xf] %vm292, %v280
  %302 = vst.msk [vmem:[%s3 + $0x24] sm:$0xf] %vm292, %v281
  // Predicated region
  $region14: #{bert_mc_forward.16} parent=0 // pred_check
    _
  $region15: #{bert_mc_forward.16} parent=0 // pred_check_branch
    %304 = sbr.rel (0) target = $region17
  $region16: #{bert_mc_forward.16} parent=0 // pred_region
    _
  $region17: #{bert_mc_forward.16} parent=0 // pred_fallthru
    _
  // Predicated region
  $region18: #{bert_mc_forward.16} parent=0 // pred_check
    _
  $region19: #{bert_mc_forward.16} parent=0 // pred_check_branch
    %306 = sbr.rel (0) target = $region21
  $region20: #{bert_mc_forward.16} parent=0 // pred_region
    _
  $region21: #{bert_mc_forward.16} parent=0 // pred_fallthru
    _

// kernel: bert_mc_forward.17
$region0: #{bert_mc_forward.17}
  #allocation0 [shape = 'u32[]', space=smem, size = 0x4, offset = 0x4, fixed_abs, tag = 'smem constant byte address 0x4 - core index']
  #allocation1 [shape = 'u32[144,128]{1,0:T(1,128)}', space=vmem, size = 0x12000, scoped, tag = 'internal scratch']
  %s0 = inlined_call_operand.vmem [shape: bf16[80,64], index: 0, kind: input, shape index: {}]
  %s1 = inlined_call_operand.vmem [shape: bf16[64,32], index: 1, kind: input, shape index: {}]
  %s2 = inlined_call_operand.vmem [shape: f32[1,32], index: 2, kind: input, shape index: {}]
  %s3 = inlined_call_operand.vmem [shape: bf16[80,32], index: 3, kind: input, shape index: {}]
  %s4 = inlined_call_operand.vmem [shape: f32[1,32], index: 4, kind: input, shape index: {}]
  %s5 = inlined_call_operand.vmem [shape: f32[1,32], index: 5, kind: input, shape index: {}]
  %s6 = inlined_call_operand.vmem [shape: bf16[80,32], index: 6, kind: output, shape index: {}]
  %s7 = sld [smem:[#allocation0]]
  $region34: #{bert_mc_forward.17} parent=0
    _
  %s9 = ssub.s32 1, %s7
  %s10 = scalar_select 0, %s9, %s7
  // Predicated region
  $region2: #{bert_mc_forward.17} parent=0 // pred_check
    _
  $region3: #{bert_mc_forward.17} parent=0 // pred_check_branch
    %12 = sbr.rel (0) target = $region5
  $region4: #{bert_mc_forward.17} parent=0 // pred_region
    _
  $region5: #{bert_mc_forward.17} parent=0 // pred_fallthru
    _
  // Predicated region
  $region6: #{bert_mc_forward.17} parent=0 // pred_check
    _
  $region7: #{bert_mc_forward.17} parent=0 // pred_check_branch
    %14 = sbr.rel (0) target = $region9
  $region8: #{bert_mc_forward.17} parent=0 // pred_region
    _
  $region9: #{bert_mc_forward.17} parent=0 // pred_fallthru
    _
  // Predicated region
  $region10: #{bert_mc_forward.17} parent=0 // pred_check
    _
  $region11: #{bert_mc_forward.17} parent=0 // pred_check_branch
    %16 = sbr.rel (0) target = $region13
  $region12: #{bert_mc_forward.17} parent=0 // pred_region
    _
  $region13: #{bert_mc_forward.17} parent=0 // pred_fallthru
    _
  // Predicated region
  $region14: #{bert_mc_forward.17} parent=0 // pred_check
    _
  $region15: #{bert_mc_forward.17} parent=0 // pred_check_branch
    %18 = sbr.rel (0) target = $region17
  $region16: #{bert_mc_forward.17} parent=0 // pred_region
    _
  $region17: #{bert_mc_forward.17} parent=0 // pred_fallthru
    _
  // Predicated region
  $region18: #{bert_mc_forward.17} parent=0 // pred_check
    _
  $region19: #{bert_mc_forward.17} parent=0 // pred_check_branch
    %20 = sbr.rel (0) target = $region21
  $region20: #{bert_mc_forward.17} parent=0 // pred_region
    _
  $region21: #{bert_mc_forward.17} parent=0 // pred_fallthru
    _
  // Predicated region
  $region22: #{bert_mc_forward.17} parent=0 // pred_check
    _
  $region23: #{bert_mc_forward.17} parent=0 // pred_check_branch
    %22 = sbr.rel (0) target = $region25
  $region24: #{bert_mc_forward.17} parent=0 // pred_region
    _
  $region25: #{bert_mc_forward.17} parent=0 // pred_fallthru
    _
  %v24 = vld [vmem:[%s0] sm:$0xf]
  %v25 = vld [vmem:[%s0 + $0x4] sm:$0xf]
  %v26 = vld [vmem:[%s0 + $0x8] sm:$0xf]
  %v27 = vld [vmem:[%s0 + $0xc] sm:$0xf]
  %v28 = vld [vmem:[%s0 + $0x10] sm:$0xf]
  %v29 = vld [vmem:[%s0 + $0x14] sm:$0xf]
  %v30 = vld [vmem:[%s0 + $0x18] sm:$0xf]
  %v31 = vld [vmem:[%s0 + $0x1c] sm:$0xf]
  %v32 = vld [vmem:[%s0 + $0x20] sm:$0xf]
  %v33 = vld [vmem:[%s0 + $0x24] sm:$0xf]
  %v34 = vld [vmem:[%s1] sm:$0xf]
  %v35 = vld [vmem:[%s1 + $0x4] sm:$0xf]
  %v36 = vld [vmem:[%s1 + $0x8] sm:$0xf]
  %v37 = vld [vmem:[%s1 + $0xc] sm:$0xf]
  %v38 = vld [vmem:[%s1 + $0x10] sm:$0xf]
  %v39 = vld [vmem:[%s1 + $0x14] sm:$0xf]
  %v40 = vld [vmem:[%s1 + $0x18] sm:$0xf]
  %v41 = vld [vmem:[%s1 + $0x1c] sm:$0xf]
  %v42 = vld [vmem:[%s2] sm:$0x1]
  %v44 = vlaneseq
  %v45 = vshrl.u32 %v44, 7
  %v46 = vsub.s32 0, %v45
  %v47 = vrot.slane %v42, %v46
  %v59 = vunpack.c.l.b16 %v24
  %v60 = vunpack.c.l.b16 %v25
  %v61 = vunpack.c.l.b16 %v26
  %v62 = vunpack.c.l.b16 %v27
  %v63 = vunpack.c.l.b16 %v28
  %v64 = vunpack.c.l.b16 %v29
  %v65 = vunpack.c.l.b16 %v30
  %v66 = vunpack.c.l.b16 %v31
  %v67 = vunpack.c.l.b16 %v32
  %v68 = vunpack.c.l.b16 %v33
  %v69 = vpack.c.b16 %v60, %v59
  %v70 = vpack.c.b16 %v62, %v61
  %v71 = vpack.c.b16 %v64, %v63
  %v72 = vpack.c.b16 %v66, %v65
  %v73 = vpack.c.b16 %v68, %v67
  %v82 = vunpack.c.l.b16 %v34
  %v83 = vunpack.c.l.b16 %v35
  %v84 = vunpack.c.l.b16 %v36
  %v85 = vunpack.c.l.b16 %v37
  %v86 = vunpack.c.l.b16 %v38
  %v87 = vunpack.c.l.b16 %v39
  %v88 = vunpack.c.l.b16 %v40
  %v89 = vunpack.c.l.b16 %v41
  %v90 = vpack.c.b16 %v83, %v82
  %v91 = vpack.c.b16 %v85, %v84
  %v92 = vpack.c.b16 %v87, %v86
  %v93 = vpack.c.b16 %v89, %v88
  %vm98 = vcmask 523264
  %v100 = vsel %vm98, %v69, 0
  %v103 = vsel %vm98, %v70, 0
  %v106 = vsel %vm98, %v71, 0
  %v109 = vsel %vm98, %v72, 0
  %v112 = vsel %vm98, %v73, 0
  %114 = vmatprep.subr.bf16.mxu0 0
  %115 = vmatpush1.bf16.msra.mxu0 %v90
  %116 = vmatprep.subr.bf16.mxu0 0
  %117 = vmatpush1.bf16.msra.mxu0 %v91
  %118 = vmatprep.subr.bf16.mxu0 0
  %119 = vmatpush1.bf16.msra.mxu0 %v92
  %120 = vmatprep.subr.bf16.mxu0 0
  %121 = vmatpush1.bf16.msra.mxu0 %v93
  %122 = vmatprep.subr.bf16.mxu0 0
  %123 = vmatpush1.bf16.msra.mxu0 0
  %124 = vmatprep.subr.bf16.mxu0 0
  %125 = vmatpush1.bf16.msra.mxu0 0
  %126 = vmatprep.subr.bf16.mxu0 0
  %127 = vmatpush1.bf16.msra.mxu0 0
  %128 = vmatprep.subr.bf16.mxu0 0
  %129 = vmatpush1.bf16.msra.mxu0 0
  %130 = vmatprep.subr.bf16.mxu0 0
  %131 = vmatpush1.bf16.msra.mxu0 0
  %132 = vmatprep.subr.bf16.mxu0 0
  %133 = vmatpush1.bf16.msra.mxu0 0
  %134 = vmatprep.subr.bf16.mxu0 0
  %135 = vmatpush1.bf16.msra.mxu0 0
  %136 = vmatprep.subr.bf16.mxu0 0
  %137 = vmatpush1.bf16.msra.mxu0 0
  %138 = vmatprep.subr.bf16.mxu0 0
  %139 = vmatpush1.bf16.msra.mxu0 0
  %140 = vmatprep.subr.bf16.mxu0 0
  %141 = vmatpush1.bf16.msra.mxu0 0
  %142 = vmatprep.subr.bf16.mxu0 0
  %143 = vmatpush1.bf16.msra.mxu0 0
  %144 = vmatprep.subr.bf16.mxu0 0
  %145 = vmatpush1.bf16.msra.mxu0 0
  %146 = vmatprep.mubr.bf16.mxu0 0
  %147 = vmatmul.mubr.bf16.gmra.mrb[0].mxu0 %v100
  %v148 = vpop.f32.mrb[0].mxu0
  %v149 = vadd.f32 %v47, %v148
  %v150 = vpop.f32.mrb[0].mxu0
  %v151 = vpop.f32.mrb[0].mxu0
  %v152 = vadd.f32 %v47, %v151
  %v153 = vpop.f32.mrb[0].mxu0
  %154 = vmatprep.mubr.bf16.mxu0 0
  %155 = vmatmul.mubr.bf16.gmra.mrb[0].mxu0 %v103
  %v156 = vpop.f32.mrb[0].mxu0
  %v157 = vadd.f32 %v47, %v156
  %v158 = vpop.f32.mrb[0].mxu0
  %v159 = vpop.f32.mrb[0].mxu0
  %v160 = vadd.f32 %v47, %v159
  %v161 = vpop.f32.mrb[0].mxu0
  %162 = vmatprep.mubr.bf16.mxu0 0
  %163 = vmatmul.mubr.bf16.gmra.mrb[0].mxu0 %v106
  %v164 = vpop.f32.mrb[0].mxu0
  %v165 = vadd.f32 %v47, %v164
  %v166 = vpop.f32.mrb[0].mxu0
  %v167 = vpop.f32.mrb[0].mxu0
  %v168 = vadd.f32 %v47, %v167
  %v169 = vpop.f32.mrb[0].mxu0
  %170 = vmatprep.mubr.bf16.mxu0 0
  %171 = vmatmul.mubr.bf16.gmra.mrb[0].mxu0 %v109
  %v172 = vpop.f32.mrb[0].mxu0
  %v173 = vadd.f32 %v47, %v172
  %v174 = vpop.f32.mrb[0].mxu0
  %v175 = vpop.f32.mrb[0].mxu0
  %v176 = vadd.f32 %v47, %v175
  %v177 = vpop.f32.mrb[0].mxu0
  %178 = vmatprep.mubr.bf16.mxu0 0
  %179 = vmatmul.mubr.bf16.gmra.mrb[0].mxu0 %v112
  %v180 = vpop.f32.mrb[0].mxu0
  %v181 = vadd.f32 %v47, %v180
  %v182 = vpop.f32.mrb[0].mxu0
  %v183 = vpop.f32.mrb[0].mxu0
  %v184 = vadd.f32 %v47, %v183
  %v185 = vpop.f32.mrb[0].mxu0
  %186 = vdwg.mxu0
  %v187 = vld [vmem:[%s3] sm:$0xf]
  %v188 = vld [vmem:[%s3 + $0x4] sm:$0xf]
  %v189 = vld [vmem:[%s3 + $0x8] sm:$0xf]
  %v190 = vld [vmem:[%s3 + $0xc] sm:$0xf]
  %v191 = vld [vmem:[%s3 + $0x10] sm:$0xf]
  %v192 = vld [vmem:[%s3 + $0x14] sm:$0xf]
  %v193 = vld [vmem:[%s3 + $0x18] sm:$0xf]
  %v194 = vld [vmem:[%s3 + $0x1c] sm:$0xf]
  %v195 = vld [vmem:[%s3 + $0x20] sm:$0xf]
  %v196 = vld [vmem:[%s3 + $0x24] sm:$0xf]
  %v197 = vunpack.c.l.bf16 %v187
  %v198 = vunpack.c.l.bf16 %v188
  %v199 = vunpack.c.l.bf16 %v189
  %v200 = vunpack.c.l.bf16 %v190
  %v201 = vunpack.c.l.bf16 %v191
  %v202 = vunpack.c.l.bf16 %v192
  %v203 = vunpack.c.l.bf16 %v193
  %v204 = vunpack.c.l.bf16 %v194
  %v205 = vunpack.c.l.bf16 %v195
  %v206 = vunpack.c.l.bf16 %v196
  %v207 = vadd.f32 %v149, %v197
  %v208 = vadd.f32 %v152, %v198
  %v209 = vadd.f32 %v157, %v199
  %v210 = vadd.f32 %v160, %v200
  %v211 = vadd.f32 %v165, %v201
  %v212 = vadd.f32 %v168, %v202
  %v213 = vadd.f32 %v173, %v203
  %v214 = vadd.f32 %v176, %v204
  %v215 = vadd.f32 %v181, %v205
  %v216 = vadd.f32 %v184, %v206
  %v217 = vld [vmem:[%s4] sm:$0x1]
  %v218 = vld [vmem:[%s5] sm:$0x1]
  %vm219 = vcmask 261120
  %v220 = vsel %vm219, %v207, 0.0
  %221 = vadd.xlane.f32.xlu0 %v220
  %v222 = vpop.xlane.xlu0 %221
  %v223 = vsel %vm219, %v208, 0.0
  %224 = vadd.xlane.f32.xlu0 %v223
  %v225 = vpop.xlane.xlu0 %224
  %v226 = vsel %vm219, %v209, 0.0
  %227 = vadd.xlane.f32.xlu0 %v226
  %v228 = vpop.xlane.xlu0 %227
  %v229 = vsel %vm219, %v210, 0.0
  %230 = vadd.xlane.f32.xlu0 %v229
  %v231 = vpop.xlane.xlu0 %230
  %v232 = vsel %vm219, %v211, 0.0
  %233 = vadd.xlane.f32.xlu0 %v232
  %v234 = vpop.xlane.xlu0 %233
  %v235 = vsel %vm219, %v212, 0.0
  %236 = vadd.xlane.f32.xlu0 %v235
  %v237 = vpop.xlane.xlu0 %236
  %v238 = vsel %vm219, %v213, 0.0
  %239 = vadd.xlane.f32.xlu0 %v238
  %v240 = vpop.xlane.xlu0 %239
  %v241 = vsel %vm219, %v214, 0.0
  %242 = vadd.xlane.f32.xlu0 %v241
  %v243 = vpop.xlane.xlu0 %242
  %v244 = vsel %vm219, %v215, 0.0
  %245 = vadd.xlane.f32.xlu0 %v244
  %v246 = vpop.xlane.xlu0 %245
  %v247 = vsel %vm219, %v216, 0.0
  %248 = vadd.xlane.f32.xlu0 %v247
  %v249 = vpop.xlane.xlu0 %248
  %v250 = vrcp.pop 32.0
  %v251 = vmul.f32 %v222, %v250
  %v252 = vmul.f32 %v225, %v250
  %v253 = vmul.f32 %v228, %v250
  %v254 = vmul.f32 %v231, %v250
  %v255 = vmul.f32 %v234, %v250
  %v256 = vmul.f32 %v237, %v250
  %v257 = vmul.f32 %v240, %v250
  %v258 = vmul.f32 %v243, %v250
  %v259 = vmul.f32 %v246, %v250
  %v260 = vmul.f32 %v249, %v250
  %v261 = vsub.f32 %v207, %v251
  %v262 = vsub.f32 %v208, %v252
  %v263 = vsub.f32 %v209, %v253
  %v264 = vsub.f32 %v210, %v254
  %v265 = vsub.f32 %v211, %v255
  %v266 = vsub.f32 %v212, %v256
  %v267 = vsub.f32 %v213, %v257
  %v268 = vsub.f32 %v214, %v258
  %v269 = vsub.f32 %v215, %v259
  %v270 = vsub.f32 %v216, %v260
  %v271 = vmul.f32 %v261, %v261
  %v272 = vmul.f32 %v262, %v262
  %v273 = vmul.f32 %v263, %v263
  %v274 = vmul.f32 %v264, %v264
  %v275 = vmul.f32 %v265, %v265
  %v276 = vmul.f32 %v266, %v266
  %v277 = vmul.f32 %v267, %v267
  %v278 = vmul.f32 %v268, %v268
  %v279 = vmul.f32 %v269, %v269
  %v280 = vmul.f32 %v270, %v270
  %v281 = vsel %vm219, %v271, 0.0
  %282 = vadd.xlane.f32.xlu0 %v281
  %v283 = vpop.xlane.xlu0 %282
  %v284 = vsel %vm219, %v272, 0.0
  %285 = vadd.xlane.f32.xlu0 %v284
  %v286 = vpop.xlane.xlu0 %285
  %v287 = vsel %vm219, %v273, 0.0
  %288 = vadd.xlane.f32.xlu0 %v287
  %v289 = vpop.xlane.xlu0 %288
  %v290 = vsel %vm219, %v274, 0.0
  %291 = vadd.xlane.f32.xlu0 %v290
  %v292 = vpop.xlane.xlu0 %291
  %v293 = vsel %vm219, %v275, 0.0
  %294 = vadd.xlane.f32.xlu0 %v293
  %v295 = vpop.xlane.xlu0 %294
  %v296 = vsel %vm219, %v276, 0.0
  %297 = vadd.xlane.f32.xlu0 %v296
  %v298 = vpop.xlane.xlu0 %297
  %v299 = vsel %vm219, %v277, 0.0
  %300 = vadd.xlane.f32.xlu0 %v299
  %v301 = vpop.xlane.xlu0 %300
  %v302 = vsel %vm219, %v278, 0.0
  %303 = vadd.xlane.f32.xlu0 %v302
  %v304 = vpop.xlane.xlu0 %303
  %v305 = vsel %vm219, %v279, 0.0
  %306 = vadd.xlane.f32.xlu0 %v305
  %v307 = vpop.xlane.xlu0 %306
  %v308 = vsel %vm219, %v280, 0.0
  %309 = vadd.xlane.f32.xlu0 %v308
  %v310 = vpop.xlane.xlu0 %309
  %v311 = vmul.f32 %v283, %v250
  %v312 = vmul.f32 %v286, %v250
  %v313 = vmul.f32 %v289, %v250
  %v314 = vmul.f32 %v292, %v250
  %v315 = vmul.f32 %v295, %v250
  %v316 = vmul.f32 %v298, %v250
  %v317 = vmul.f32 %v301, %v250
  %v318 = vmul.f32 %v304, %v250
  %v319 = vmul.f32 %v307, %v250
  %v320 = vmul.f32 %v310, %v250
  %v321 = vadd.f32 %v311, 1e-12
  %v322 = vadd.f32 %v312, 1e-12
  %v323 = vadd.f32 %v313, 1e-12
  %v324 = vadd.f32 %v314, 1e-12
  %v325 = vadd.f32 %v315, 1e-12
  %v326 = vadd.f32 %v316, 1e-12
  %v327 = vadd.f32 %v317, 1e-12
  %v328 = vadd.f32 %v318, 1e-12
  %v329 = vadd.f32 %v319, 1e-12
  %v330 = vadd.f32 %v320, 1e-12
  %v331 = vrsqrt.pop %v321
  %v332 = vrsqrt.pop %v322
  %v333 = vrsqrt.pop %v323
  %v334 = vrsqrt.pop %v324
  %v335 = vrsqrt.pop %v325
  %v336 = vrsqrt.pop %v326
  %v337 = vrsqrt.pop %v327
  %v338 = vrsqrt.pop %v328
  %v339 = vrsqrt.pop %v329
  %v340 = vrsqrt.pop %v330
  %v341 = vmul.f32 %v261, %v331
  %v342 = vmul.f32 %v262, %v332
  %v343 = vmul.f32 %v263, %v333
  %v344 = vmul.f32 %v264, %v334
  %v345 = vmul.f32 %v265, %v335
  %v346 = vmul.f32 %v266, %v336
  %v347 = vmul.f32 %v267, %v337
  %v348 = vmul.f32 %v268, %v338
  %v349 = vmul.f32 %v269, %v339
  %v350 = vmul.f32 %v270, %v340
  %v352 = vlaneseq
  %v353 = vshrl.u32 %v352, 7
  %v354 = vsub.s32 0, %v353
  %v355 = vrot.slane %v217, %v354
  %v357 = vmul.f32 %v341, %v355
  %v358 = vmul.f32 %v342, %v355
  %v359 = vmul.f32 %v343, %v355
  %v360 = vmul.f32 %v344, %v355
  %v361 = vmul.f32 %v345, %v355
  %v362 = vmul.f32 %v346, %v355
  %v363 = vmul.f32 %v347, %v355
  %v364 = vmul.f32 %v348, %v355
  %v365 = vmul.f32 %v349, %v355
  %v366 = vmul.f32 %v350, %v355
  %v368 = vlaneseq
  %v369 = vshrl.u32 %v368, 7
  %v370 = vsub.s32 0, %v369
  %v371 = vrot.slane %v218, %v370
  %v373 = vadd.f32 %v357, %v371
  %v374 = vadd.f32 %v358, %v371
  %v375 = vadd.f32 %v359, %v371
  %v376 = vadd.f32 %v360, %v371
  %v377 = vadd.f32 %v361, %v371
  %v378 = vadd.f32 %v362, %v371
  %v379 = vadd.f32 %v363, %v371
  %v380 = vadd.f32 %v364, %v371
  %v381 = vadd.f32 %v365, %v371
  %v382 = vadd.f32 %v366, %v371
  %v383 = vpack.c.bf16 %v374, %v373
  %v384 = vpack.c.bf16 %v376, %v375
  %v385 = vpack.c.bf16 %v378, %v377
  %v386 = vpack.c.bf16 %v380, %v379
  %v387 = vpack.c.bf16 %v382, %v381
  %v393 = vunpack.c.l.b16 %v383
  %v394 = vunpack.c.h.b16 %v383
  %v395 = vunpack.c.l.b16 %v384
  %v396 = vunpack.c.h.b16 %v384
  %v397 = vunpack.c.l.b16 %v385
  %v398 = vunpack.c.h.b16 %v385
  %v399 = vunpack.c.l.b16 %v386
  %v400 = vunpack.c.h.b16 %v386
  %v401 = vunpack.c.l.b16 %v387
  %v402 = vunpack.c.h.b16 %v387
  %v403 = vpack.c.b16 %v393, %v393
  %v404 = vpack.c.b16 %v394, %v394
  %v405 = vpack.c.b16 %v395, %v395
  %v406 = vpack.c.b16 %v396, %v396
  %v407 = vpack.c.b16 %v397, %v397
  %v408 = vpack.c.b16 %v398, %v398
  %v409 = vpack.c.b16 %v399, %v399
  %v410 = vpack.c.b16 %v400, %v400
  %v411 = vpack.c.b16 %v401, %v401
  %v412 = vpack.c.b16 %v402, %v402
  %vm423 = vcmask 257024
  %424 = vst.msk [vmem:[%s6] sm:$0xf] %vm423, %v403
  %425 = vst.msk [vmem:[%s6 + $0x4] sm:$0xf] %vm423, %v404
  %426 = vst.msk [vmem:[%s6 + $0x8] sm:$0xf] %vm423, %v405
  %427 = vst.msk [vmem:[%s6 + $0xc] sm:$0xf] %vm423, %v406
  %428 = vst.msk [vmem:[%s6 + $0x10] sm:$0xf] %vm423, %v407
  %429 = vst.msk [vmem:[%s6 + $0x14] sm:$0xf] %vm423, %v408
  %430 = vst.msk [vmem:[%s6 + $0x18] sm:$0xf] %vm423, %v409
  %431 = vst.msk [vmem:[%s6 + $0x1c] sm:$0xf] %vm423, %v410
  %432 = vst.msk [vmem:[%s6 + $0x20] sm:$0xf] %vm423, %v411
  %433 = vst.msk [vmem:[%s6 + $0x24] sm:$0xf] %vm423, %v412
  // Predicated region
  $region26: #{bert_mc_forward.17} parent=0 // pred_check
    _
  $region27: #{bert_mc_forward.17} parent=0 // pred_check_branch
    %435 = sbr.rel (0) target = $region29
  $region28: #{bert_mc_forward.17} parent=0 // pred_region
    _
  $region29: #{bert_mc_forward.17} parent=0 // pred_fallthru
    _
  // Predicated region
  $region30: #{bert_mc_forward.17} parent=0 // pred_check
    _
  $region31: #{bert_mc_forward.17} parent=0 // pred_check_branch
    %437 = sbr.rel (0) target = $region33
  $region32: #{bert_mc_forward.17} parent=0 // pred_region
    _
  $region33: #{bert_mc_forward.17} parent=0 // pred_fallthru
    _

// kernel: bert_mc_forward.23
$region0: #{bert_mc_forward.23}
  #allocation0 [shape = 'u32[]', space=smem, size = 0x4, offset = 0x4, fixed_abs, tag = 'smem constant byte address 0x4 - core index']
  #allocation1 [shape = 'u32[144,128]{1,0:T(1,128)}', space=vmem, size = 0x12000, scoped, tag = 'internal scratch']
  #allocation2 [shape = 'f32[1,1]{1,0:T(1,128)S(1)}', space=vmem, size = 0x200, scoped, tag = 'scoped memory for bert_mc_forward.23']
  %s0 = inlined_call_operand.vmem [shape: bf16[10,32], index: 0, kind: input, shape index: {}]
  %s1 = inlined_call_operand.vmem [shape: bf16[32,32], index: 1, kind: input, shape index: {}]
  %s2 = inlined_call_operand.vmem [shape: f32[1,32], index: 2, kind: input, shape index: {}]
  %s3 = inlined_call_operand.vmem [shape: bf16[32,1], index: 3, kind: input, shape index: {}]
  %s4 = inlined_call_operand.<no memory space> [shape: f32[1,1], index: 4, kind: input, shape index: {}]
  %s5 = inlined_call_operand.vmem [shape: f32[10,1], index: 5, kind: output, shape index: {}]
  %s6 = sld [smem:[#allocation0]]
  $region30: #{bert_mc_forward.23} parent=0
    _
  %s8 = ssub.s32 1, %s6
  %s9 = scalar_select 0, %s8, %s6
  %v10 = vstv %s4
  %11 = vst [vmem:[#allocation2] sm:$0x1] %v10
  // Predicated region
  $region2: #{bert_mc_forward.23} parent=0 // pred_check
    _
  $region3: #{bert_mc_forward.23} parent=0 // pred_check_branch
    %13 = sbr.rel (0) target = $region5
  $region4: #{bert_mc_forward.23} parent=0 // pred_region
    _
  $region5: #{bert_mc_forward.23} parent=0 // pred_fallthru
    _
  // Predicated region
  $region6: #{bert_mc_forward.23} parent=0 // pred_check
    _
  $region7: #{bert_mc_forward.23} parent=0 // pred_check_branch
    %15 = sbr.rel (0) target = $region9
  $region8: #{bert_mc_forward.23} parent=0 // pred_region
    _
  $region9: #{bert_mc_forward.23} parent=0 // pred_fallthru
    _
  // Predicated region
  $region10: #{bert_mc_forward.23} parent=0 // pred_check
    _
  $region11: #{bert_mc_forward.23} parent=0 // pred_check_branch
    %17 = sbr.rel (0) target = $region13
  $region12: #{bert_mc_forward.23} parent=0 // pred_region
    _
  $region13: #{bert_mc_forward.23} parent=0 // pred_fallthru
    _
  // Predicated region
  $region14: #{bert_mc_forward.23} parent=0 // pred_check
    _
  $region15: #{bert_mc_forward.23} parent=0 // pred_check_branch
    %19 = sbr.rel (0) target = $region17
  $region16: #{bert_mc_forward.23} parent=0 // pred_region
    _
  $region17: #{bert_mc_forward.23} parent=0 // pred_fallthru
    _
  // Predicated region
  $region18: #{bert_mc_forward.23} parent=0 // pred_check
    _
  $region19: #{bert_mc_forward.23} parent=0 // pred_check_branch
    %21 = sbr.rel (0) target = $region21
  $region20: #{bert_mc_forward.23} parent=0 // pred_region
    _
  $region21: #{bert_mc_forward.23} parent=0 // pred_fallthru
    _
  %v23 = vld [vmem:[%s0] sm:$0xf]
  %v24 = vld [vmem:[%s0 + $0x4] sm:$0x1]
  %v25 = vld [vmem:[%s1] sm:$0xf]
  %v26 = vld [vmem:[%s1 + $0x4] sm:$0xf]
  %v27 = vld [vmem:[%s1 + $0x8] sm:$0xf]
  %v28 = vld [vmem:[%s1 + $0xc] sm:$0xf]
  %v29 = vld [vmem:[%s2] sm:$0x1]
  %v31 = vlaneseq
  %v32 = vshrl.u32 %v31, 7
  %v33 = vsub.s32 0, %v32
  %v34 = vrot.slane %v29, %v33
  %v38 = vunpack.c.l.b16 %v23
  %v39 = vunpack.c.l.b16 %v24
  %v40 = vpack.c.b16 %v39, %v38
  %v45 = vunpack.c.l.b16 %v25
  %v46 = vunpack.c.l.b16 %v26
  %v47 = vunpack.c.l.b16 %v27
  %v48 = vunpack.c.l.b16 %v28
  %v49 = vpack.c.b16 %v46, %v45
  %v50 = vpack.c.b16 %v48, %v47
  %vm53 = vcmask 261120
  %v55 = vsel %vm53, %v40, 0
  %57 = vmatprep.subr.bf16.mxu0 0
  %58 = vmatpush1.bf16.msra.mxu0 %v49
  %59 = vmatprep.subr.bf16.mxu0 0
  %60 = vmatpush1.bf16.msra.mxu0 %v50
  %61 = vmatprep.subr.bf16.mxu0 0
  %62 = vmatpush1.bf16.msra.mxu0 0
  %63 = vmatprep.subr.bf16.mxu0 0
  %64 = vmatpush1.bf16.msra.mxu0 0
  %65 = vmatprep.subr.bf16.mxu0 0
  %66 = vmatpush1.bf16.msra.mxu0 0
  %67 = vmatprep.subr.bf16.mxu0 0
  %68 = vmatpush1.bf16.msra.mxu0 0
  %69 = vmatprep.subr.bf16.mxu0 0
  %70 = vmatpush1.bf16.msra.mxu0 0
  %71 = vmatprep.subr.bf16.mxu0 0
  %72 = vmatpush1.bf16.msra.mxu0 0
  %73 = vmatprep.subr.bf16.mxu0 0
  %74 = vmatpush1.bf16.msra.mxu0 0
  %75 = vmatprep.subr.bf16.mxu0 0
  %76 = vmatpush1.bf16.msra.mxu0 0
  %77 = vmatprep.subr.bf16.mxu0 0
  %78 = vmatpush1.bf16.msra.mxu0 0
  %79 = vmatprep.subr.bf16.mxu0 0
  %80 = vmatpush1.bf16.msra.mxu0 0
  %81 = vmatprep.subr.bf16.mxu0 0
  %82 = vmatpush1.bf16.msra.mxu0 0
  %83 = vmatprep.subr.bf16.mxu0 0
  %84 = vmatpush1.bf16.msra.mxu0 0
  %85 = vmatprep.subr.bf16.mxu0 0
  %86 = vmatpush1.bf16.msra.mxu0 0
  %87 = vmatprep.subr.bf16.mxu0 0
  %88 = vmatpush1.bf16.msra.mxu0 0
  %89 = vmatprep.mubr.bf16.mxu0 0
  %90 = vmatmul.mubr.bf16.gmra.mrb[0].mxu0 %v55
  %v91 = vpop.f32.mrb[0].mxu0
  %v92 = vadd.f32 %v34, %v91
  %v93 = vpop.f32.mrb[0].mxu0
  %v94 = vpop.f32.mrb[0].mxu0
  %v95 = vadd.f32 %v34, %v94
  %v96 = vpop.f32.mrb[0].mxu0
  %97 = vdwg.mxu0
  %v98 = vtanh.pop %v92
  %v99 = vtanh.pop %v95
  %v100 = vld [vmem:[%s3] sm:$0xf]
  %v101 = vld [vmem:[%s3 + $0x4] sm:$0xf]
  %v102 = vld [vmem:[%s3 + $0x8] sm:$0xf]
  %v103 = vld [vmem:[%s3 + $0xc] sm:$0xf]
  %v104 = vunpack.c.l.bf16 %v100
  %v105 = vunpack.c.l.bf16 %v101
  %v106 = vunpack.c.l.bf16 %v102
  %v107 = vunpack.c.l.bf16 %v103
  %v108 = vld [vmem:[#allocation2] sm:$0x1]
  %v110 = vlaneseq
  %v111 = vshrl.u32 %v110, 7
  %v112 = vsub.s32 0, %v111
  %v113 = vrot.slane %v108, %v112
  %v116 = vsel %vm53, %v98, 0
  %v119 = vsel %vm53, %v99, 0
  %121 = vmatprep.subr.mxu0 0.0
  %122 = vmatpush1.msra.mxu0 %v104
  %123 = vmatprep.subr.mxu0 0.0
  %124 = vmatpush1.msra.mxu0 %v105
  %125 = vmatprep.subr.mxu0 0.0
  %126 = vmatpush1.msra.mxu0 %v106
  %127 = vmatprep.subr.mxu0 0.0
  %128 = vmatpush1.msra.mxu0 %v107
  %129 = vmatprep.subr.mxu0 0.0
  %130 = vmatpush1.msra.mxu0 0.0
  %131 = vmatprep.subr.mxu0 0.0
  %132 = vmatpush1.msra.mxu0 0.0
  %133 = vmatprep.subr.mxu0 0.0
  %134 = vmatpush1.msra.mxu0 0.0
  %135 = vmatprep.subr.mxu0 0.0
  %136 = vmatpush1.msra.mxu0 0.0
  %137 = vmatprep.subr.mxu0 0.0
  %138 = vmatpush1.msra.mxu0 0.0
  %139 = vmatprep.subr.mxu0 0.0
  %140 = vmatpush1.msra.mxu0 0.0
  %141 = vmatprep.subr.mxu0 0.0
  %142 = vmatpush1.msra.mxu0 0.0
  %143 = vmatprep.subr.mxu0 0.0
  %144 = vmatpush1.msra.mxu0 0.0
  %145 = vmatprep.subr.mxu0 0.0
  %146 = vmatpush1.msra.mxu0 0.0
  %147 = vmatprep.subr.mxu0 0.0
  %148 = vmatpush1.msra.mxu0 0.0
  %149 = vmatprep.subr.mxu0 0.0
  %150 = vmatpush1.msra.mxu0 0.0
  %151 = vmatprep.subr.mxu0 0.0
  %152 = vmatpush1.msra.mxu0 0.0
  %153 = vmatprep.subr.mxu0 0.0
  %154 = vmatpush1.msra.mxu0 0.0
  %155 = vmatprep.subr.mxu0 0.0
  %156 = vmatpush1.msra.mxu0 0.0
  %157 = vmatprep.subr.mxu0 0.0
  %158 = vmatpush1.msra.mxu0 0.0
  %159 = vmatprep.subr.mxu0 0.0
  %160 = vmatpush1.msra.mxu0 0.0
  %161 = vmatprep.subr.mxu0 0.0
  %162 = vmatpush1.msra.mxu0 0.0
  %163 = vmatprep.subr.mxu0 0.0
  %164 = vmatpush1.msra.mxu0 0.0
  %165 = vmatprep.subr.mxu0 0.0
  %166 = vmatpush1.msra.mxu0 0.0
  %167 = vmatprep.subr.mxu0 0.0
  %168 = vmatpush1.msra.mxu0 0.0
  %169 = vmatprep.subr.mxu0 0.0
  %170 = vmatpush1.msra.mxu0 0.0
  %171 = vmatprep.subr.mxu0 0.0
  %172 = vmatpush1.msra.mxu0 0.0
  %173 = vmatprep.subr.mxu0 0.0
  %174 = vmatpush1.msra.mxu0 0.0
  %175 = vmatprep.subr.mxu0 0.0
  %176 = vmatpush1.msra.mxu0 0.0
  %177 = vmatprep.subr.mxu0 0.0
  %178 = vmatpush1.msra.mxu0 0.0
  %179 = vmatprep.subr.mxu0 0.0
  %180 = vmatpush1.msra.mxu0 0.0
  %181 = vmatprep.subr.mxu0 0.0
  %182 = vmatpush1.msra.mxu0 0.0
  %183 = vmatprep.subr.mxu0 0.0
  %184 = vmatpush1.msra.mxu0 0.0
  %185 = vmatprep.mubr.f32.mxu0 0.0
  %186 = vmatmul.mubr.f32.gmra.mrb[0].mxu0 %v116
  %v187 = vpop.f32.mrb[0].mxu0
  %v188 = vadd.f32 %v113, %v187
  %v189 = vpop.f32.mrb[0].mxu0
  %190 = vmatprep.mubr.f32.mxu0 0.0
  %191 = vmatmul.mubr.f32.gmra.mrb[0].mxu0 %v119
  %v192 = vpop.f32.mrb[0].mxu0
  %v193 = vadd.f32 %v113, %v192
  %v194 = vpop.f32.mrb[0].mxu0
  %195 = vdwg.mxu0
  %vm196 = vcmask 7168
  %197 = vst.msk [vmem:[%s5] sm:$0xff] %vm196, %v188
  %vm198 = vcmask 1024
  %199 = vst.msk [vmem:[%s5 + $0x8] sm:$0x3] %vm198, %v193
  // Predicated region
  $region22: #{bert_mc_forward.23} parent=0 // pred_check
    _
  $region23: #{bert_mc_forward.23} parent=0 // pred_check_branch
    %201 = sbr.rel (0) target = $region25
  $region24: #{bert_mc_forward.23} parent=0 // pred_region
    _
  $region25: #{bert_mc_forward.23} parent=0 // pred_fallthru
    _
  // Predicated region
  $region26: #{bert_mc_forward.23} parent=0 // pred_check
    _
  $region27: #{bert_mc_forward.23} parent=0 // pred_check_branch
    %203 = sbr.rel (0) target = $region29
  $region28: #{bert_mc_forward.23} parent=0 // pred_region
    _
  $region29: #{bert_mc_forward.23} parent=0 // pred_fallthru
    _

</llo_original>
